<compile_context>
chip_gen: v7x
topology: tpu7x:2x2x1
jax: 0.10.0
libtpu: 0.0.40
codegen_flags: <defaults>
</compile_context>

<pallas_src>
import jax
import jax.numpy as jnp
from jax.experimental import pallas as pl

# ---------------- config (small, consistent with the module) ----------------
B = 2          # batch
N = 8          # sequence length
D = 32         # num_channels
H = 4          # num_heads
DH = D // H    # channels per head
LN_EPS = 1e-5
DP_SCALE = DH ** (-0.5)


def self_attention_kernel(x_ref, ln_ref, w_ref, b_ref, out_ref, ego_ref):
    # ---- LayerNorm over the whole (B*N, D) token slab (biased var, eps=1e-5) ----
    x = x_ref[...].astype(jnp.float32).reshape(B * N, D)
    mean = jnp.mean(x, axis=-1, keepdims=True)
    xc = x - mean
    var = jnp.mean(xc * xc, axis=-1, keepdims=True)
    xn = xc * jax.lax.rsqrt(var + LN_EPS)
    xn = xn * ln_ref[0:1, :] + ln_ref[1:2, :]                       # (B*N, D)

    # ---- fused projection: one (B*N, D) x (D, 4D) MXU push, 128-lane dense ----
    qkvo = jnp.dot(xn, w_ref[...], preferred_element_type=jnp.float32) + b_ref[...]
    qkvo = qkvo.reshape(B, N, 4 * D)                                # (B, N, 4D)
    q = qkvo[:, :, 0 * D:1 * D] * DP_SCALE                          # (B, N, D)
    k = qkvo[:, :, 1 * D:2 * D]
    v = qkvo[:, :, 2 * D:3 * D]

    # ---- per-head attention, batched over the batch dim ----
    o_heads = []
    ego_heads = []
    for h in range(H):                                              # static, H=4
        sl = slice(h * DH, (h + 1) * DH)
        qh, kh, vh = q[..., sl], k[..., sl], v[..., sl]             # (B, N, DH)
        s = jnp.einsum('bqd,bkd->bqk', qh, kh,
                       preferred_element_type=jnp.float32)          # (B, N, N)
        s = s - jnp.max(s, axis=-1, keepdims=True)
        p = jnp.exp(s)
        p = p * pl.reciprocal(jnp.sum(p, axis=-1, keepdims=True), approx=False)
        ego_heads.append(p[:, 0, :])                                # (B, N): query pos 0
        o_heads.append(jnp.einsum('bqk,bkd->bqd', p, vh,
                                  preferred_element_type=jnp.float32))

    o = jnp.concatenate(o_heads, axis=-1).reshape(B * N, D)         # (B*N, D)
    ego = jnp.concatenate(ego_heads, axis=-1)                       # (B, H*N)

    # ---- output projection uses the 4th block of the fused weight slab ----
    out = jnp.dot(o, w_ref[:, 3 * D:4 * D], preferred_element_type=jnp.float32)
    out = out + b_ref[:, 3 * D:4 * D]

    out_ref[...] = out.astype(out_ref.dtype)                        # (B*N, D)
    ego_ref[...] = ego.astype(ego_ref.dtype)                        # (B, H*N)


def self_attention(x, params):
    """x: (B, N, D) float32. Returns (last_hidden_state (B,N,D), ego_attn (B,H,N))."""
    ln = jnp.stack([params["ln_gamma"], params["ln_beta"]], axis=0)           # (2, D)
    w_fused = jnp.concatenate(
        [params["wq"], params["wk"], params["wv"], params["wo"]], axis=1)     # (D, 4D)
    b_fused = jnp.concatenate(
        [params["bq"], params["bk"], params["bv"], params["bo"]]).reshape(1, 4 * D)

    out_flat, ego_flat = pl.pallas_call(
        self_attention_kernel,
        out_shape=(
            jax.ShapeDtypeStruct((B * N, D), jnp.float32),   # last_hidden_state slab
            jax.ShapeDtypeStruct((B, H * N), jnp.float32),   # ego-attention slab
        ),
    )(x, ln, w_fused, b_fused)

    # Free, layout-preserving reshapes back to the module's logical shapes.
    return out_flat.reshape(B, N, D), ego_flat.reshape(B, H, N)


def reference(x, params):
    """Pure-JAX reference mirroring the PyTorch forward."""
    gamma, beta = params["ln_gamma"], params["ln_beta"]
    mean = jnp.mean(x, axis=-1, keepdims=True)
    var = jnp.mean((x - mean) ** 2, axis=-1, keepdims=True)
    xn = (x - mean) / jnp.sqrt(var + LN_EPS) * gamma + beta

    q = xn @ params["wq"] + params["bq"]
    k = xn @ params["wk"] + params["bk"]
    v = xn @ params["wv"] + params["bv"]

    def split_heads(t):  # (B, N, D) -> (B, H, N, DH)
        return t.reshape(B, N, H, DH).transpose(0, 2, 1, 3)

    q, k, v = split_heads(q) * DP_SCALE, split_heads(k), split_heads(v)
    attn = jnp.einsum("bhic,bhjc->bhij", q, k)
    attn = jax.nn.softmax(attn, axis=-1)
    ego = attn[..., 0, :]
    o = jnp.einsum("bhij,bhjc->bhic", attn, v)
    o = o.transpose(0, 2, 1, 3).reshape(B, N, D)
    out = o @ params["wo"] + params["bo"]
    return out, ego


def make_params(key):
    ks = jax.random.split(key, 10)
    scale = 0.05
    return {
        "ln_gamma": 1.0 + scale * jax.random.normal(ks[0], (D,), jnp.float32),
        "ln_beta": scale * jax.random.normal(ks[1], (D,), jnp.float32),
        "wq": scale * jax.random.normal(ks[2], (D, D), jnp.float32),
        "bq": scale * jax.random.normal(ks[3], (D,), jnp.float32),
        "wk": scale * jax.random.normal(ks[4], (D, D), jnp.float32),
        "bk": scale * jax.random.normal(ks[5], (D,), jnp.float32),
        "wv": scale * jax.random.normal(ks[6], (D, D), jnp.float32),
        "bv": scale * jax.random.normal(ks[7], (D,), jnp.float32),
        "wo": scale * jax.random.normal(ks[8], (D, D), jnp.float32),
        "bo": scale * jax.random.normal(ks[9], (D,), jnp.float32),
    }


if __name__ == "__main__":
    key = jax.random.PRNGKey(0)
    kx, kp = jax.random.split(key)
    x = jax.random.normal(kx, (B, N, D), jnp.float32)
    params = make_params(kp)

    out, ego = jax.block_until_ready(self_attention(x, params))
    out_ref, ego_ref = reference(x, params)

    assert out.shape == (B, N, D) and ego.shape == (B, H, N)
    assert jnp.allclose(out, out_ref, atol=1e-4, rtol=1e-4)
    assert jnp.allclose(ego, ego_ref, atol=1e-4, rtol=1e-4)
    # TODO(synk): pad_mask / rotary embeddings / kv_cache / causal masking / dropout
    # are inactive in the default SelfAttention forward and are not implemented here.
    print("KERNEL_OK")
</pallas_src>

<mosaic_0001>
module attributes {stable_mosaic.version = 11 : i64} {
  func.func @self_attention_kernel(%arg0: memref<2x8x32xf32, #tpu.memory_space<vmem>>, %arg1: memref<2x32xf32, #tpu.memory_space<vmem>>, %arg2: memref<32x128xf32, #tpu.memory_space<vmem>>, %arg3: memref<1x128xf32, #tpu.memory_space<vmem>>, %arg4: memref<16x32xf32, #tpu.memory_space<vmem>>, %arg5: memref<2x32xf32, #tpu.memory_space<vmem>>) attributes {dimension_semantics = [], scalar_prefetch = 0 : i64, scratch_operands = 0 : i64, tpu.core_type = #tpu.core_type<tc>} {
    %c0 = arith.constant 0 : index
    %c0_0 = arith.constant 0 : index
    %c0_1 = arith.constant 0 : index
    %0 = vector.load %arg0[%c0, %c0_0, %c0_1] : memref<2x8x32xf32, #tpu.memory_space<vmem>>, vector<2x8x32xf32>
    %1 = vector.shape_cast %0 : vector<2x8x32xf32> to vector<16x32xf32>
    %cst = arith.constant dense<0.000000e+00> : vector<16xf32>
    %2 = vector.multi_reduction <add>, %1, %cst [1] : vector<16x32xf32> to vector<16xf32>
    %3 = vector.shape_cast %2 : vector<16xf32> to vector<16x1xf32>
    %cst_2 = arith.constant 3.200000e+01 : f32
    %4 = vector.broadcast %cst_2 : f32 to vector<16x1xf32>
    %5 = arith.divf %3, %4 : vector<16x1xf32>
    %6 = vector.broadcast %5 : vector<16x1xf32> to vector<16x32xf32>
    %7 = arith.subf %1, %6 : vector<16x32xf32>
    %8 = arith.mulf %7, %7 : vector<16x32xf32>
    %cst_3 = arith.constant dense<0.000000e+00> : vector<16xf32>
    %9 = vector.multi_reduction <add>, %8, %cst_3 [1] : vector<16x32xf32> to vector<16xf32>
    %10 = vector.shape_cast %9 : vector<16xf32> to vector<16x1xf32>
    %cst_4 = arith.constant 3.200000e+01 : f32
    %11 = vector.broadcast %cst_4 : f32 to vector<16x1xf32>
    %12 = arith.divf %10, %11 : vector<16x1xf32>
    %cst_5 = arith.constant 9.99999974E-6 : f32
    %13 = vector.broadcast %cst_5 : f32 to vector<16x1xf32>
    %14 = arith.addf %12, %13 : vector<16x1xf32>
    %15 = math.rsqrt %14 : vector<16x1xf32>
    %16 = vector.broadcast %15 : vector<16x1xf32> to vector<16x32xf32>
    %17 = arith.mulf %7, %16 : vector<16x32xf32>
    %c0_6 = arith.constant 0 : index
    %c0_7 = arith.constant 0 : index
    %18 = vector.load %arg1[%c0_6, %c0_7] : memref<2x32xf32, #tpu.memory_space<vmem>>, vector<1x32xf32>
    %19 = vector.broadcast %18 : vector<1x32xf32> to vector<16x32xf32>
    %20 = arith.mulf %17, %19 : vector<16x32xf32>
    %c1 = arith.constant 1 : index
    %c0_8 = arith.constant 0 : index
    %21 = vector.load %arg1[%c1, %c0_8] : memref<2x32xf32, #tpu.memory_space<vmem>>, vector<1x32xf32>
    %22 = vector.broadcast %21 : vector<1x32xf32> to vector<16x32xf32>
    %23 = arith.addf %20, %22 : vector<16x32xf32>
    %c0_9 = arith.constant 0 : index
    %c0_10 = arith.constant 0 : index
    %24 = vector.load %arg2[%c0_9, %c0_10] : memref<32x128xf32, #tpu.memory_space<vmem>>, vector<32x128xf32>
    %cst_11 = arith.constant dense<0.000000e+00> : vector<16x128xf32>
    %25 = tpu.matmul %23, %24, %cst_11 {dimension_numbers = #tpu.dot_dimension_numbers<[1], [0], [0], [1], [0, 0, 1, 1], [], []>} : vector<16x32xf32>, vector<32x128xf32>, vector<16x128xf32> -> vector<16x128xf32>
    %c0_12 = arith.constant 0 : index
    %c0_13 = arith.constant 0 : index
    %26 = vector.load %arg3[%c0_12, %c0_13] : memref<1x128xf32, #tpu.memory_space<vmem>>, vector<1x128xf32>
    %27 = vector.broadcast %26 : vector<1x128xf32> to vector<16x128xf32>
    %28 = arith.addf %25, %27 : vector<16x128xf32>
    %29 = vector.shape_cast %28 : vector<16x128xf32> to vector<2x8x128xf32>
    %30 = vector.extract_strided_slice %29 {offsets = [0, 0, 0], sizes = [2, 8, 32], strides = [1, 1, 1]} : vector<2x8x128xf32> to vector<2x8x32xf32>
    %cst_14 = arith.constant 0.353553385 : f32
    %31 = vector.broadcast %cst_14 : f32 to vector<2x8x32xf32>
    %32 = arith.mulf %30, %31 : vector<2x8x32xf32>
    %33 = vector.extract_strided_slice %29 {offsets = [0, 0, 32], sizes = [2, 8, 32], strides = [1, 1, 1]} : vector<2x8x128xf32> to vector<2x8x32xf32>
    %34 = vector.extract_strided_slice %29 {offsets = [0, 0, 64], sizes = [2, 8, 32], strides = [1, 1, 1]} : vector<2x8x128xf32> to vector<2x8x32xf32>
    %35 = vector.extract_strided_slice %32 {offsets = [0, 0, 0], sizes = [2, 8, 8], strides = [1, 1, 1]} : vector<2x8x32xf32> to vector<2x8x8xf32>
    %36 = vector.extract_strided_slice %33 {offsets = [0, 0, 0], sizes = [2, 8, 8], strides = [1, 1, 1]} : vector<2x8x32xf32> to vector<2x8x8xf32>
    %37 = vector.extract_strided_slice %34 {offsets = [0, 0, 0], sizes = [2, 8, 8], strides = [1, 1, 1]} : vector<2x8x32xf32> to vector<2x8x8xf32>
    "tpu.trace_start"() <{level = 10 : i32, message = "bqd,bkd->bqk"}> : () -> ()
    %cst_15 = arith.constant dense<0.000000e+00> : vector<2x8x8xf32>
    %38 = tpu.matmul %35, %36, %cst_15 {dimension_numbers = #tpu.dot_dimension_numbers<[2], [2], [1], [1], [0, 0, 0, 1, 1, 1], [0], [0]>} : vector<2x8x8xf32>, vector<2x8x8xf32>, vector<2x8x8xf32> -> vector<2x8x8xf32>
    "tpu.trace_stop"() : () -> ()
    %cst_16 = arith.constant dense<0xFF800000> : vector<2x8xf32>
    %39 = vector.multi_reduction <maximumf>, %38, %cst_16 [2] : vector<2x8x8xf32> to vector<2x8xf32>
    %40 = vector.shape_cast %39 : vector<2x8xf32> to vector<2x8x1xf32>
    %41 = vector.broadcast %40 : vector<2x8x1xf32> to vector<2x8x8xf32>
    %42 = arith.subf %38, %41 : vector<2x8x8xf32>
    %43 = math.exp %42 : vector<2x8x8xf32>
    %cst_17 = arith.constant dense<0.000000e+00> : vector<2x8xf32>
    %44 = vector.multi_reduction <add>, %43, %cst_17 [2] : vector<2x8x8xf32> to vector<2x8xf32>
    %45 = vector.shape_cast %44 : vector<2x8xf32> to vector<2x8x1xf32>
    %46 = tpu.reciprocal %45 : vector<2x8x1xf32> -> vector<2x8x1xf32>
    %47 = vector.broadcast %46 : vector<2x8x1xf32> to vector<2x8x8xf32>
    %48 = arith.mulf %43, %47 : vector<2x8x8xf32>
    %49 = vector.extract_strided_slice %48 {offsets = [0, 0, 0], sizes = [2, 1, 8], strides = [1, 1, 1]} : vector<2x8x8xf32> to vector<2x1x8xf32>
    %50 = vector.shape_cast %49 : vector<2x1x8xf32> to vector<2x8xf32>
    "tpu.trace_start"() <{level = 10 : i32, message = "bqk,bkd->bqd"}> : () -> ()
    %cst_18 = arith.constant dense<0.000000e+00> : vector<2x8x8xf32>
    %51 = tpu.matmul %48, %37, %cst_18 {dimension_numbers = #tpu.dot_dimension_numbers<[2], [1], [1], [2], [0, 0, 0, 1, 1, 2], [0], [0]>} : vector<2x8x8xf32>, vector<2x8x8xf32>, vector<2x8x8xf32> -> vector<2x8x8xf32>
    "tpu.trace_stop"() : () -> ()
    %52 = vector.extract_strided_slice %32 {offsets = [0, 0, 8], sizes = [2, 8, 8], strides = [1, 1, 1]} : vector<2x8x32xf32> to vector<2x8x8xf32>
    %53 = vector.extract_strided_slice %33 {offsets = [0, 0, 8], sizes = [2, 8, 8], strides = [1, 1, 1]} : vector<2x8x32xf32> to vector<2x8x8xf32>
    %54 = vector.extract_strided_slice %34 {offsets = [0, 0, 8], sizes = [2, 8, 8], strides = [1, 1, 1]} : vector<2x8x32xf32> to vector<2x8x8xf32>
    "tpu.trace_start"() <{level = 10 : i32, message = "bqd,bkd->bqk"}> : () -> ()
    %cst_19 = arith.constant dense<0.000000e+00> : vector<2x8x8xf32>
    %55 = tpu.matmul %52, %53, %cst_19 {dimension_numbers = #tpu.dot_dimension_numbers<[2], [2], [1], [1], [0, 0, 0, 1, 1, 1], [0], [0]>} : vector<2x8x8xf32>, vector<2x8x8xf32>, vector<2x8x8xf32> -> vector<2x8x8xf32>
    "tpu.trace_stop"() : () -> ()
    %cst_20 = arith.constant dense<0xFF800000> : vector<2x8xf32>
    %56 = vector.multi_reduction <maximumf>, %55, %cst_20 [2] : vector<2x8x8xf32> to vector<2x8xf32>
    %57 = vector.shape_cast %56 : vector<2x8xf32> to vector<2x8x1xf32>
    %58 = vector.broadcast %57 : vector<2x8x1xf32> to vector<2x8x8xf32>
    %59 = arith.subf %55, %58 : vector<2x8x8xf32>
    %60 = math.exp %59 : vector<2x8x8xf32>
    %cst_21 = arith.constant dense<0.000000e+00> : vector<2x8xf32>
    %61 = vector.multi_reduction <add>, %60, %cst_21 [2] : vector<2x8x8xf32> to vector<2x8xf32>
    %62 = vector.shape_cast %61 : vector<2x8xf32> to vector<2x8x1xf32>
    %63 = tpu.reciprocal %62 : vector<2x8x1xf32> -> vector<2x8x1xf32>
    %64 = vector.broadcast %63 : vector<2x8x1xf32> to vector<2x8x8xf32>
    %65 = arith.mulf %60, %64 : vector<2x8x8xf32>
    %66 = vector.extract_strided_slice %65 {offsets = [0, 0, 0], sizes = [2, 1, 8], strides = [1, 1, 1]} : vector<2x8x8xf32> to vector<2x1x8xf32>
    %67 = vector.shape_cast %66 : vector<2x1x8xf32> to vector<2x8xf32>
    "tpu.trace_start"() <{level = 10 : i32, message = "bqk,bkd->bqd"}> : () -> ()
    %cst_22 = arith.constant dense<0.000000e+00> : vector<2x8x8xf32>
    %68 = tpu.matmul %65, %54, %cst_22 {dimension_numbers = #tpu.dot_dimension_numbers<[2], [1], [1], [2], [0, 0, 0, 1, 1, 2], [0], [0]>} : vector<2x8x8xf32>, vector<2x8x8xf32>, vector<2x8x8xf32> -> vector<2x8x8xf32>
    "tpu.trace_stop"() : () -> ()
    %69 = vector.extract_strided_slice %32 {offsets = [0, 0, 16], sizes = [2, 8, 8], strides = [1, 1, 1]} : vector<2x8x32xf32> to vector<2x8x8xf32>
    %70 = vector.extract_strided_slice %33 {offsets = [0, 0, 16], sizes = [2, 8, 8], strides = [1, 1, 1]} : vector<2x8x32xf32> to vector<2x8x8xf32>
    %71 = vector.extract_strided_slice %34 {offsets = [0, 0, 16], sizes = [2, 8, 8], strides = [1, 1, 1]} : vector<2x8x32xf32> to vector<2x8x8xf32>
    "tpu.trace_start"() <{level = 10 : i32, message = "bqd,bkd->bqk"}> : () -> ()
    %cst_23 = arith.constant dense<0.000000e+00> : vector<2x8x8xf32>
    %72 = tpu.matmul %69, %70, %cst_23 {dimension_numbers = #tpu.dot_dimension_numbers<[2], [2], [1], [1], [0, 0, 0, 1, 1, 1], [0], [0]>} : vector<2x8x8xf32>, vector<2x8x8xf32>, vector<2x8x8xf32> -> vector<2x8x8xf32>
    "tpu.trace_stop"() : () -> ()
    %cst_24 = arith.constant dense<0xFF800000> : vector<2x8xf32>
    %73 = vector.multi_reduction <maximumf>, %72, %cst_24 [2] : vector<2x8x8xf32> to vector<2x8xf32>
    %74 = vector.shape_cast %73 : vector<2x8xf32> to vector<2x8x1xf32>
    %75 = vector.broadcast %74 : vector<2x8x1xf32> to vector<2x8x8xf32>
    %76 = arith.subf %72, %75 : vector<2x8x8xf32>
    %77 = math.exp %76 : vector<2x8x8xf32>
    %cst_25 = arith.constant dense<0.000000e+00> : vector<2x8xf32>
    %78 = vector.multi_reduction <add>, %77, %cst_25 [2] : vector<2x8x8xf32> to vector<2x8xf32>
    %79 = vector.shape_cast %78 : vector<2x8xf32> to vector<2x8x1xf32>
    %80 = tpu.reciprocal %79 : vector<2x8x1xf32> -> vector<2x8x1xf32>
    %81 = vector.broadcast %80 : vector<2x8x1xf32> to vector<2x8x8xf32>
    %82 = arith.mulf %77, %81 : vector<2x8x8xf32>
    %83 = vector.extract_strided_slice %82 {offsets = [0, 0, 0], sizes = [2, 1, 8], strides = [1, 1, 1]} : vector<2x8x8xf32> to vector<2x1x8xf32>
    %84 = vector.shape_cast %83 : vector<2x1x8xf32> to vector<2x8xf32>
    "tpu.trace_start"() <{level = 10 : i32, message = "bqk,bkd->bqd"}> : () -> ()
    %cst_26 = arith.constant dense<0.000000e+00> : vector<2x8x8xf32>
    %85 = tpu.matmul %82, %71, %cst_26 {dimension_numbers = #tpu.dot_dimension_numbers<[2], [1], [1], [2], [0, 0, 0, 1, 1, 2], [0], [0]>} : vector<2x8x8xf32>, vector<2x8x8xf32>, vector<2x8x8xf32> -> vector<2x8x8xf32>
    "tpu.trace_stop"() : () -> ()
    %86 = vector.extract_strided_slice %32 {offsets = [0, 0, 24], sizes = [2, 8, 8], strides = [1, 1, 1]} : vector<2x8x32xf32> to vector<2x8x8xf32>
    %87 = vector.extract_strided_slice %33 {offsets = [0, 0, 24], sizes = [2, 8, 8], strides = [1, 1, 1]} : vector<2x8x32xf32> to vector<2x8x8xf32>
    %88 = vector.extract_strided_slice %34 {offsets = [0, 0, 24], sizes = [2, 8, 8], strides = [1, 1, 1]} : vector<2x8x32xf32> to vector<2x8x8xf32>
    "tpu.trace_start"() <{level = 10 : i32, message = "bqd,bkd->bqk"}> : () -> ()
    %cst_27 = arith.constant dense<0.000000e+00> : vector<2x8x8xf32>
    %89 = tpu.matmul %86, %87, %cst_27 {dimension_numbers = #tpu.dot_dimension_numbers<[2], [2], [1], [1], [0, 0, 0, 1, 1, 1], [0], [0]>} : vector<2x8x8xf32>, vector<2x8x8xf32>, vector<2x8x8xf32> -> vector<2x8x8xf32>
    "tpu.trace_stop"() : () -> ()
    %cst_28 = arith.constant dense<0xFF800000> : vector<2x8xf32>
    %90 = vector.multi_reduction <maximumf>, %89, %cst_28 [2] : vector<2x8x8xf32> to vector<2x8xf32>
    %91 = vector.shape_cast %90 : vector<2x8xf32> to vector<2x8x1xf32>
    %92 = vector.broadcast %91 : vector<2x8x1xf32> to vector<2x8x8xf32>
    %93 = arith.subf %89, %92 : vector<2x8x8xf32>
    %94 = math.exp %93 : vector<2x8x8xf32>
    %cst_29 = arith.constant dense<0.000000e+00> : vector<2x8xf32>
    %95 = vector.multi_reduction <add>, %94, %cst_29 [2] : vector<2x8x8xf32> to vector<2x8xf32>
    %96 = vector.shape_cast %95 : vector<2x8xf32> to vector<2x8x1xf32>
    %97 = tpu.reciprocal %96 : vector<2x8x1xf32> -> vector<2x8x1xf32>
    %98 = vector.broadcast %97 : vector<2x8x1xf32> to vector<2x8x8xf32>
    %99 = arith.mulf %94, %98 : vector<2x8x8xf32>
    %100 = vector.extract_strided_slice %99 {offsets = [0, 0, 0], sizes = [2, 1, 8], strides = [1, 1, 1]} : vector<2x8x8xf32> to vector<2x1x8xf32>
    %101 = vector.shape_cast %100 : vector<2x1x8xf32> to vector<2x8xf32>
    "tpu.trace_start"() <{level = 10 : i32, message = "bqk,bkd->bqd"}> : () -> ()
    %cst_30 = arith.constant dense<0.000000e+00> : vector<2x8x8xf32>
    %102 = tpu.matmul %99, %88, %cst_30 {dimension_numbers = #tpu.dot_dimension_numbers<[2], [1], [1], [2], [0, 0, 0, 1, 1, 2], [0], [0]>} : vector<2x8x8xf32>, vector<2x8x8xf32>, vector<2x8x8xf32> -> vector<2x8x8xf32>
    "tpu.trace_stop"() : () -> ()
    %103 = tpu.concatenate %51, %68, %85, %102 in 2 : vector<2x8x8xf32>, vector<2x8x8xf32>, vector<2x8x8xf32>, vector<2x8x8xf32> -> vector<2x8x32xf32>
    %104 = vector.shape_cast %103 : vector<2x8x32xf32> to vector<16x32xf32>
    %105 = tpu.concatenate %50, %67, %84, %101 in 1 : vector<2x8xf32>, vector<2x8xf32>, vector<2x8xf32>, vector<2x8xf32> -> vector<2x32xf32>
    %c0_31 = arith.constant 0 : index
    %c96 = arith.constant 96 : index
    %106 = vector.load %arg2[%c0_31, %c96] : memref<32x128xf32, #tpu.memory_space<vmem>>, vector<32x32xf32>
    %cst_32 = arith.constant dense<0.000000e+00> : vector<16x32xf32>
    %107 = tpu.matmul %104, %106, %cst_32 {dimension_numbers = #tpu.dot_dimension_numbers<[1], [0], [0], [1], [0, 0, 1, 1], [], []>} : vector<16x32xf32>, vector<32x32xf32>, vector<16x32xf32> -> vector<16x32xf32>
    %c0_33 = arith.constant 0 : index
    %c96_34 = arith.constant 96 : index
    %108 = vector.load %arg3[%c0_33, %c96_34] : memref<1x128xf32, #tpu.memory_space<vmem>>, vector<1x32xf32>
    %109 = vector.broadcast %108 : vector<1x32xf32> to vector<16x32xf32>
    %110 = arith.addf %107, %109 : vector<16x32xf32>
    %c0_35 = arith.constant 0 : index
    %c0_36 = arith.constant 0 : index
    %111 = vector.load %arg4[%c0_35, %c0_36] : memref<16x32xf32, #tpu.memory_space<vmem>>, vector<16x32xf32>
    tpu.vector_store %arg4[%c0_35, %c0_36], %110 {strides = array<i32>} : memref<16x32xf32, #tpu.memory_space<vmem>>, vector<16x32xf32>,
    %c0_37 = arith.constant 0 : index
    %c0_38 = arith.constant 0 : index
    %112 = vector.load %arg5[%c0_37, %c0_38] : memref<2x32xf32, #tpu.memory_space<vmem>>, vector<2x32xf32>
    tpu.vector_store %arg5[%c0_37, %c0_38], %105 {strides = array<i32>} : memref<2x32xf32, #tpu.memory_space<vmem>>, vector<2x32xf32>,
    return
  }
}

</mosaic_0001>

<llo_original>
// kernel: tpu_custom_call.1
$region0: #{tpu_custom_call.1}
  #allocation0 [shape = 'u32[]', space=smem, size = 0x4, offset = 0x4, fixed_abs, tag = 'smem constant byte address 0x4 - core index']
  #allocation1 [shape = 'u32[144,128]{1,0:T(1,128)}', space=vmem, size = 0x12000, scoped, tag = 'internal scratch']
  %s0 = inlined_call_operand.hbm [shape: f32[2,8,32], index: 0, kind: input, shape index: {}]
  %s1 = inlined_call_operand.vmem [shape: f32[2,32], index: 1, kind: input, shape index: {}]
  %s2 = inlined_call_operand.hbm [shape: f32[32,128], index: 2, kind: input, shape index: {}]
  %s3 = inlined_call_operand.vmem [shape: f32[1,128], index: 3, kind: input, shape index: {}]
  %s4 = inlined_call_operand.hbm [shape: f32[16,32], index: 4, kind: output, shape index: {0}]
  %s5 = inlined_call_operand.hbm [shape: f32[2,32], index: 5, kind: output, shape index: {1}]
  %6 = xla_tuple %s4, %s5
  %s7 = sld [smem:[#allocation0]]
  $region42: #{tpu_custom_call.1} parent=0
    _
  %s9 = ssub.s32 1, %s7
  %s10 = scalar_select 0, %s9, %s7
  $region1: #{tpu_custom_call.1} parent=0
    #allocation2 [shape = 'u8[8192]{0}', space=vmem, size = 0x2000, scoped, tag = 'input window, operand 0, single buffered']
    #allocation3 [shape = 's32[1]{0}', space=sflag, size = 0x4, scoped, tag = 'scoped memory for tpu_custom_call.1']
    #allocation4 [shape = 's32[1]{0}', space=sflag, size = 0x4, scoped, tag = 'scoped memory for tpu_custom_call.1']
    #allocation5 [shape = 'u8[16384]{0}', space=vmem, size = 0x4000, scoped, tag = 'input window, operand 2, single buffered']
    #allocation6 [shape = 's32[1]{0}', space=sflag, size = 0x4, scoped, tag = 'scoped memory for tpu_custom_call.1']
    #allocation7 [shape = 'u8[8192]{0}', space=vmem, size = 0x2000, scoped, tag = 'output window, operand 0, single buffered']
    #allocation8 [shape = 'u8[1024]{0}', space=vmem, size = 0x400, scoped, tag = 'output window, operand 1, single buffered']
    #allocation9 [shape = 's32[1]{0}', space=sflag, size = 0x4, scoped, tag = 'scoped memory for tpu_custom_call.1']
    %11 = vsyncpa [#allocation3], 0
    %12 = vsyncpa [#allocation6], 0
    %13 = vsyncpa [#allocation4], 0
    %14 = vsyncpa [#allocation9], 0
    // Predicated region
    $region2: #{tpu_custom_call.1} parent=1 // pred_check
      _
    $region3: #{tpu_custom_call.1} parent=1 // pred_check_branch
      %16 = sbr.rel (0) target = $region5
    $region4: #{tpu_custom_call.1} parent=1 // pred_region
      %s18 = ssub.s32 256, 256
      %19 = vsyncadd [#allocation3], %s18
      %s20 = sshll.u32 [#allocation2], 4
      %s21 = int_to_ptr.vmem [resolvable:$true] %s20
      %26 = dma.hbm_to_vmem [thread:$0]  %s0, 256, %s21, [#allocation3], 128, 128, 8
    $region5: #{tpu_custom_call.1} parent=1 // pred_fallthru
      _
    // Predicated region
    $region6: #{tpu_custom_call.1} parent=1 // pred_check
      _
    $region7: #{tpu_custom_call.1} parent=1 // pred_check_branch
      %28 = sbr.rel (0) target = $region9
    $region8: #{tpu_custom_call.1} parent=1 // pred_region
      _
    $region9: #{tpu_custom_call.1} parent=1 // pred_fallthru
      _
    // Predicated region
    $region10: #{tpu_custom_call.1} parent=1 // pred_check
      _
    $region11: #{tpu_custom_call.1} parent=1 // pred_check_branch
      %30 = sbr.rel (0) target = $region13
    $region12: #{tpu_custom_call.1} parent=1 // pred_region
      %s32 = ssub.s32 512, 512
      %33 = vsyncadd [#allocation6], %s32
      %s34 = sshll.u32 [#allocation5], 4
      %s35 = int_to_ptr.vmem [resolvable:$true] %s34
      %40 = dma.hbm_to_vmem [thread:$0]  %s2, 512, %s35, [#allocation6], 128, 128, 8
    $region13: #{tpu_custom_call.1} parent=1 // pred_fallthru
      _
    // Predicated region
    $region14: #{tpu_custom_call.1} parent=1 // pred_check
      _
    $region15: #{tpu_custom_call.1} parent=1 // pred_check_branch
      %42 = sbr.rel (0) target = $region17
    $region16: #{tpu_custom_call.1} parent=1 // pred_region
      _
    $region17: #{tpu_custom_call.1} parent=1 // pred_fallthru
      _
    // Predicated region
    $region18: #{tpu_custom_call.1} parent=1 // pred_check
      _
    $region19: #{tpu_custom_call.1} parent=1 // pred_check_branch
      %44 = sbr.rel (0) target = $region21
    $region20: #{tpu_custom_call.1} parent=1 // pred_region
      %45 = dma.done [#allocation3], 256
    $region21: #{tpu_custom_call.1} parent=1 // pred_fallthru
      _
    // Predicated region
    $region22: #{tpu_custom_call.1} parent=1 // pred_check
      _
    $region23: #{tpu_custom_call.1} parent=1 // pred_check_branch
      %47 = sbr.rel (0) target = $region25
    $region24: #{tpu_custom_call.1} parent=1 // pred_region
      %48 = dma.done [#allocation6], 512
    $region25: #{tpu_custom_call.1} parent=1 // pred_fallthru
      _
    %v49 = vld [vmem:[#allocation2] sm:$0xff]
    %v50 = vld [vmem:[#allocation2 + $0x8] sm:$0xff]
    %vm51 = vcmask 261120
    %v52 = vsel %vm51, %v49, 0.0
    %53 = vadd.xlane.f32.xlu0 %v52
    %v54 = vpop.xlane.xlu0 %53
    %v55 = vsel %vm51, %v50, 0.0
    %56 = vadd.xlane.f32.xlu0 %v55
    %v57 = vpop.xlane.xlu0 %56
    %v58 = vrcp.pop 32.0
    %v59 = vmul.f32 %v54, %v58
    %v60 = vmul.f32 %v57, %v58
    %v61 = vsub.f32 %v49, %v59
    %v62 = vsub.f32 %v50, %v60
    %v63 = vmul.f32 %v61, %v61
    %v64 = vmul.f32 %v62, %v62
    %v65 = vsel %vm51, %v63, 0.0
    %66 = vadd.xlane.f32.xlu0 %v65
    %v67 = vpop.xlane.xlu0 %66
    %v68 = vsel %vm51, %v64, 0.0
    %69 = vadd.xlane.f32.xlu0 %v68
    %v70 = vpop.xlane.xlu0 %69
    %v71 = vmul.f32 %v67, %v58
    %v72 = vmul.f32 %v70, %v58
    %v73 = vadd.f32 %v71, 1e-05
    %v74 = vadd.f32 %v72, 1e-05
    %v75 = vrsqrt.pop %v73
    %v76 = vrsqrt.pop %v74
    %v77 = vmul.f32 %v61, %v75
    %v78 = vmul.f32 %v62, %v76
    %v79 = vld [vmem:[%s1] sm:$0x1]
    %v80 = vlaneseq
    %v81 = vshrl.u32 %v80, 7
    %v82 = vsub.s32 0, %v81
    %v83 = vrot.slane %v79, %v82
    %v84 = vmul.f32 %v77, %v83
    %v85 = vmul.f32 %v78, %v83
    %v86 = vld [vmem:[%s1 + $0x1] sm:$0x1]
    %v87 = vlaneseq
    %v88 = vshrl.u32 %v87, 7
    %v89 = vsub.s32 0, %v88
    %v90 = vrot.slane %v86, %v89
    %v91 = vadd.f32 %v84, %v90
    %v92 = vadd.f32 %v85, %v90
    %v93 = vld [vmem:[#allocation5] sm:$0xff]
    %v94 = vld [vmem:[#allocation5 + $0x8] sm:$0xff]
    %v95 = vld [vmem:[#allocation5 + $0x10] sm:$0xff]
    %v96 = vld [vmem:[#allocation5 + $0x18] sm:$0xff]
    %v97 = vld [vmem:[%s3] sm:$0x1]
    %v99 = vlaneseq
    %v100 = vshrl.u32 %v99, 7
    %v101 = vsub.s32 0, %v100
    %v102 = vrot.slane %v97, %v101
    %v105 = vsel %vm51, %v91, 0
    %v108 = vsel %vm51, %v92, 0
    %110 = vmatprep.subr.mxu0 0.0
    %111 = vmatpush1.msra.mxu0 %v93
    %112 = vmatprep.subr.mxu0 0.0
    %113 = vmatpush1.msra.mxu0 %v94
    %114 = vmatprep.subr.mxu0 0.0
    %115 = vmatpush1.msra.mxu0 %v95
    %116 = vmatprep.subr.mxu0 0.0
    %117 = vmatpush1.msra.mxu0 %v96
    %118 = vmatprep.subr.mxu0 0.0
    %119 = vmatpush1.msra.mxu0 0.0
    %120 = vmatprep.subr.mxu0 0.0
    %121 = vmatpush1.msra.mxu0 0.0
    %122 = vmatprep.subr.mxu0 0.0
    %123 = vmatpush1.msra.mxu0 0.0
    %124 = vmatprep.subr.mxu0 0.0
    %125 = vmatpush1.msra.mxu0 0.0
    %126 = vmatprep.subr.mxu0 0.0
    %127 = vmatpush1.msra.mxu0 0.0
    %128 = vmatprep.subr.mxu0 0.0
    %129 = vmatpush1.msra.mxu0 0.0
    %130 = vmatprep.subr.mxu0 0.0
    %131 = vmatpush1.msra.mxu0 0.0
    %132 = vmatprep.subr.mxu0 0.0
    %133 = vmatpush1.msra.mxu0 0.0
    %134 = vmatprep.subr.mxu0 0.0
    %135 = vmatpush1.msra.mxu0 0.0
    %136 = vmatprep.subr.mxu0 0.0
    %137 = vmatpush1.msra.mxu0 0.0
    %138 = vmatprep.subr.mxu0 0.0
    %139 = vmatpush1.msra.mxu0 0.0
    %140 = vmatprep.subr.mxu0 0.0
    %141 = vmatpush1.msra.mxu0 0.0
    %142 = vmatprep.subr.mxu0 0.0
    %143 = vmatpush1.msra.mxu0 0.0
    %144 = vmatprep.subr.mxu0 0.0
    %145 = vmatpush1.msra.mxu0 0.0
    %146 = vmatprep.subr.mxu0 0.0
    %147 = vmatpush1.msra.mxu0 0.0
    %148 = vmatprep.subr.mxu0 0.0
    %149 = vmatpush1.msra.mxu0 0.0
    %150 = vmatprep.subr.mxu0 0.0
    %151 = vmatpush1.msra.mxu0 0.0
    %152 = vmatprep.subr.mxu0 0.0
    %153 = vmatpush1.msra.mxu0 0.0
    %154 = vmatprep.subr.mxu0 0.0
    %155 = vmatpush1.msra.mxu0 0.0
    %156 = vmatprep.subr.mxu0 0.0
    %157 = vmatpush1.msra.mxu0 0.0
    %158 = vmatprep.subr.mxu0 0.0
    %159 = vmatpush1.msra.mxu0 0.0
    %160 = vmatprep.subr.mxu0 0.0
    %161 = vmatpush1.msra.mxu0 0.0
    %162 = vmatprep.subr.mxu0 0.0
    %163 = vmatpush1.msra.mxu0 0.0
    %164 = vmatprep.subr.mxu0 0.0
    %165 = vmatpush1.msra.mxu0 0.0
    %166 = vmatprep.subr.mxu0 0.0
    %167 = vmatpush1.msra.mxu0 0.0
    %168 = vmatprep.subr.mxu0 0.0
    %169 = vmatpush1.msra.mxu0 0.0
    %170 = vmatprep.subr.mxu0 0.0
    %171 = vmatpush1.msra.mxu0 0.0
    %172 = vmatprep.subr.mxu0 0.0
    %173 = vmatpush1.msra.mxu0 0.0
    %174 = vmatprep.mubr.f32.mxu0 0.0
    %175 = vmatmul.mubr.f32.gmra.mrb[0].mxu0 %v105
    %v176 = vpop.f32.mrb[0].mxu0
    %v177 = vadd.f32 %v102, %v176
    %v178 = vpop.f32.mrb[0].mxu0
    %179 = vmatprep.mubr.f32.mxu0 0.0
    %180 = vmatmul.mubr.f32.gmra.mrb[0].mxu0 %v108
    %v181 = vpop.f32.mrb[0].mxu0
    %v182 = vadd.f32 %v102, %v181
    %v183 = vpop.f32.mrb[0].mxu0
    %184 = vdwg.mxu0
    %v185 = vmul.f32 %v177, 0.35355338
    %v186 = vmul.f32 %v182, 0.35355338
    %188 = vrot.lane.b32.xlu0 %v177, 96
    %v189 = vpop.permute.xlu0 %188
    %vm190 = vcmask 64512
    %v192 = vsel %vm190, %v185, 0
    %v194 = vsel %vm190, %v189, 0
    %196 = vmatprep.subr.mxu0 0.0
    %197 = vmatpush1.xpose.msra.mxu0 %v194
    %198 = vmatprep.subr.mxu0 0.0
    %199 = vmatpush1.xpose.msra.mxu0 0.0
    %200 = vmatprep.subr.mxu0 0.0
    %201 = vmatpush1.xpose.msra.mxu0 0.0
    %202 = vmatprep.subr.mxu0 0.0
    %203 = vmatpush1.xpose.msra.mxu0 0.0
    %204 = vmatprep.subr.mxu0 0.0
    %205 = vmatpush1.xpose.msra.mxu0 0.0
    %206 = vmatprep.subr.mxu0 0.0
    %207 = vmatpush1.xpose.msra.mxu0 0.0
    %208 = vmatprep.subr.mxu0 0.0
    %209 = vmatpush1.xpose.msra.mxu0 0.0
    %210 = vmatprep.subr.mxu0 0.0
    %211 = vmatpush1.xpose.msra.mxu0 0.0
    %212 = vmatprep.subr.mxu0 0.0
    %213 = vmatpush1.xpose.msra.mxu0 0.0
    %214 = vmatprep.subr.mxu0 0.0
    %215 = vmatpush1.xpose.msra.mxu0 0.0
    %216 = vmatprep.subr.mxu0 0.0
    %217 = vmatpush1.xpose.msra.mxu0 0.0
    %218 = vmatprep.subr.mxu0 0.0
    %219 = vmatpush1.xpose.msra.mxu0 0.0
    %220 = vmatprep.subr.mxu0 0.0
    %221 = vmatpush1.xpose.msra.mxu0 0.0
    %222 = vmatprep.subr.mxu0 0.0
    %223 = vmatpush1.xpose.msra.mxu0 0.0
    %224 = vmatprep.subr.mxu0 0.0
    %225 = vmatpush1.xpose.msra.mxu0 0.0
    %226 = vmatprep.subr.mxu0 0.0
    %227 = vmatpush1.xpose.msra.mxu0 0.0
    %228 = vmatprep.subr.mxu0 0.0
    %229 = vmatpush1.xpose.msra.mxu0 0.0
    %230 = vmatprep.subr.mxu0 0.0
    %231 = vmatpush1.xpose.msra.mxu0 0.0
    %232 = vmatprep.subr.mxu0 0.0
    %233 = vmatpush1.xpose.msra.mxu0 0.0
    %234 = vmatprep.subr.mxu0 0.0
    %235 = vmatpush1.xpose.msra.mxu0 0.0
    %236 = vmatprep.subr.mxu0 0.0
    %237 = vmatpush1.xpose.msra.mxu0 0.0
    %238 = vmatprep.subr.mxu0 0.0
    %239 = vmatpush1.xpose.msra.mxu0 0.0
    %240 = vmatprep.subr.mxu0 0.0
    %241 = vmatpush1.xpose.msra.mxu0 0.0
    %242 = vmatprep.subr.mxu0 0.0
    %243 = vmatpush1.xpose.msra.mxu0 0.0
    %244 = vmatprep.subr.mxu0 0.0
    %245 = vmatpush1.xpose.msra.mxu0 0.0
    %246 = vmatprep.subr.mxu0 0.0
    %247 = vmatpush1.xpose.msra.mxu0 0.0
    %248 = vmatprep.subr.mxu0 0.0
    %249 = vmatpush1.xpose.msra.mxu0 0.0
    %250 = vmatprep.subr.mxu0 0.0
    %251 = vmatpush1.xpose.msra.mxu0 0.0
    %252 = vmatprep.subr.mxu0 0.0
    %253 = vmatpush1.xpose.msra.mxu0 0.0
    %254 = vmatprep.subr.mxu0 0.0
    %255 = vmatpush1.xpose.msra.mxu0 0.0
    %256 = vmatprep.subr.mxu0 0.0
    %257 = vmatpush1.xpose.msra.mxu0 0.0
    %258 = vmatprep.subr.mxu0 0.0
    %259 = vmatpush1.xpose.msra.mxu0 0.0
    %260 = vmatprep.mubr.f32.mxu0 0.0
    %261 = vmatmul.mubr.f32.gmra.mrb[0].mxu0 %v192
    %v262 = vpop.f32.mrb[0].mxu0
    %v263 = vadd.f32 0.0, %v262
    %v264 = vpop.f32.mrb[0].mxu0
    %265 = vdwg.mxu0
    %267 = vrot.lane.b32.xlu0 %v182, 96
    %v268 = vpop.permute.xlu0 %267
    %v270 = vsel %vm190, %v186, 0
    %v272 = vsel %vm190, %v268, 0
    %274 = vmatprep.subr.mxu0 0.0
    %275 = vmatpush1.xpose.msra.mxu0 %v272
    %276 = vmatprep.subr.mxu0 0.0
    %277 = vmatpush1.xpose.msra.mxu0 0.0
    %278 = vmatprep.subr.mxu0 0.0
    %279 = vmatpush1.xpose.msra.mxu0 0.0
    %280 = vmatprep.subr.mxu0 0.0
    %281 = vmatpush1.xpose.msra.mxu0 0.0
    %282 = vmatprep.subr.mxu0 0.0
    %283 = vmatpush1.xpose.msra.mxu0 0.0
    %284 = vmatprep.subr.mxu0 0.0
    %285 = vmatpush1.xpose.msra.mxu0 0.0
    %286 = vmatprep.subr.mxu0 0.0
    %287 = vmatpush1.xpose.msra.mxu0 0.0
    %288 = vmatprep.subr.mxu0 0.0
    %289 = vmatpush1.xpose.msra.mxu0 0.0
    %290 = vmatprep.subr.mxu0 0.0
    %291 = vmatpush1.xpose.msra.mxu0 0.0
    %292 = vmatprep.subr.mxu0 0.0
    %293 = vmatpush1.xpose.msra.mxu0 0.0
    %294 = vmatprep.subr.mxu0 0.0
    %295 = vmatpush1.xpose.msra.mxu0 0.0
    %296 = vmatprep.subr.mxu0 0.0
    %297 = vmatpush1.xpose.msra.mxu0 0.0
    %298 = vmatprep.subr.mxu0 0.0
    %299 = vmatpush1.xpose.msra.mxu0 0.0
    %300 = vmatprep.subr.mxu0 0.0
    %301 = vmatpush1.xpose.msra.mxu0 0.0
    %302 = vmatprep.subr.mxu0 0.0
    %303 = vmatpush1.xpose.msra.mxu0 0.0
    %304 = vmatprep.subr.mxu0 0.0
    %305 = vmatpush1.xpose.msra.mxu0 0.0
    %306 = vmatprep.subr.mxu0 0.0
    %307 = vmatpush1.xpose.msra.mxu0 0.0
    %308 = vmatprep.subr.mxu0 0.0
    %309 = vmatpush1.xpose.msra.mxu0 0.0
    %310 = vmatprep.subr.mxu0 0.0
    %311 = vmatpush1.xpose.msra.mxu0 0.0
    %312 = vmatprep.subr.mxu0 0.0
    %313 = vmatpush1.xpose.msra.mxu0 0.0
    %314 = vmatprep.subr.mxu0 0.0
    %315 = vmatpush1.xpose.msra.mxu0 0.0
    %316 = vmatprep.subr.mxu0 0.0
    %317 = vmatpush1.xpose.msra.mxu0 0.0
    %318 = vmatprep.subr.mxu0 0.0
    %319 = vmatpush1.xpose.msra.mxu0 0.0
    %320 = vmatprep.subr.mxu0 0.0
    %321 = vmatpush1.xpose.msra.mxu0 0.0
    %322 = vmatprep.subr.mxu0 0.0
    %323 = vmatpush1.xpose.msra.mxu0 0.0
    %324 = vmatprep.subr.mxu0 0.0
    %325 = vmatpush1.xpose.msra.mxu0 0.0
    %326 = vmatprep.subr.mxu0 0.0
    %327 = vmatpush1.xpose.msra.mxu0 0.0
    %328 = vmatprep.subr.mxu0 0.0
    %329 = vmatpush1.xpose.msra.mxu0 0.0
    %330 = vmatprep.subr.mxu0 0.0
    %331 = vmatpush1.xpose.msra.mxu0 0.0
    %332 = vmatprep.subr.mxu0 0.0
    %333 = vmatpush1.xpose.msra.mxu0 0.0
    %334 = vmatprep.subr.mxu0 0.0
    %335 = vmatpush1.xpose.msra.mxu0 0.0
    %336 = vmatprep.subr.mxu0 0.0
    %337 = vmatpush1.xpose.msra.mxu0 0.0
    %338 = vmatprep.mubr.f32.mxu0 0.0
    %339 = vmatmul.mubr.f32.gmra.mrb[0].mxu0 %v270
    %v340 = vpop.f32.mrb[0].mxu0
    %v341 = vadd.f32 0.0, %v340
    %v342 = vpop.f32.mrb[0].mxu0
    %343 = vdwg.mxu0
    %v344 = vsel %vm190, %v263, -inf
    %345 = vmax.xlane.f32.xlu0 %v344
    %v346 = vpop.xlane.xlu0 %345
    %v347 = vsel %vm190, %v341, -inf
    %348 = vmax.xlane.f32.xlu0 %v347
    %v349 = vpop.xlane.xlu0 %348
    %v350 = vsub.f32 %v263, %v346
    %v351 = vsub.f32 %v341, %v349
    %v352 = vmul.f32 %v350, 1.442695
    %v353 = vpow.pop %v352
    %v354 = vmul.f32 %v351, 1.442695
    %v355 = vpow.pop %v354
    %v356 = vsel %vm190, %v353, 0.0
    %357 = vadd.xlane.f32.xlu0 %v356
    %v358 = vpop.xlane.xlu0 %357
    %v359 = vsel %vm190, %v355, 0.0
    %360 = vadd.xlane.f32.xlu0 %v359
    %v361 = vpop.xlane.xlu0 %360
    %v362 = vrcp.pop %v358
    %v363 = vrcp.pop %v361
    %v364 = vmul.f32 %v353, %v362
    %v365 = vmul.f32 %v355, %v363
    %366 = vrot.lane.b32.xlu0 %v177, 64
    %v367 = vpop.permute.xlu0 %366
    %v370 = vsel %vm190, %v364, 0
    %372 = vmatprep.subr.mxu0 0.0
    %373 = vmatpush1.msra.mxu0 %v367
    %374 = vmatprep.subr.mxu0 0.0
    %375 = vmatpush1.msra.mxu0 0.0
    %376 = vmatprep.subr.mxu0 0.0
    %377 = vmatpush1.msra.mxu0 0.0
    %378 = vmatprep.subr.mxu0 0.0
    %379 = vmatpush1.msra.mxu0 0.0
    %380 = vmatprep.subr.mxu0 0.0
    %381 = vmatpush1.msra.mxu0 0.0
    %382 = vmatprep.subr.mxu0 0.0
    %383 = vmatpush1.msra.mxu0 0.0
    %384 = vmatprep.subr.mxu0 0.0
    %385 = vmatpush1.msra.mxu0 0.0
    %386 = vmatprep.subr.mxu0 0.0
    %387 = vmatpush1.msra.mxu0 0.0
    %388 = vmatprep.subr.mxu0 0.0
    %389 = vmatpush1.msra.mxu0 0.0
    %390 = vmatprep.subr.mxu0 0.0
    %391 = vmatpush1.msra.mxu0 0.0
    %392 = vmatprep.subr.mxu0 0.0
    %393 = vmatpush1.msra.mxu0 0.0
    %394 = vmatprep.subr.mxu0 0.0
    %395 = vmatpush1.msra.mxu0 0.0
    %396 = vmatprep.subr.mxu0 0.0
    %397 = vmatpush1.msra.mxu0 0.0
    %398 = vmatprep.subr.mxu0 0.0
    %399 = vmatpush1.msra.mxu0 0.0
    %400 = vmatprep.subr.mxu0 0.0
    %401 = vmatpush1.msra.mxu0 0.0
    %402 = vmatprep.subr.mxu0 0.0
    %403 = vmatpush1.msra.mxu0 0.0
    %404 = vmatprep.subr.mxu0 0.0
    %405 = vmatpush1.msra.mxu0 0.0
    %406 = vmatprep.subr.mxu0 0.0
    %407 = vmatpush1.msra.mxu0 0.0
    %408 = vmatprep.subr.mxu0 0.0
    %409 = vmatpush1.msra.mxu0 0.0
    %410 = vmatprep.subr.mxu0 0.0
    %411 = vmatpush1.msra.mxu0 0.0
    %412 = vmatprep.subr.mxu0 0.0
    %413 = vmatpush1.msra.mxu0 0.0
    %414 = vmatprep.subr.mxu0 0.0
    %415 = vmatpush1.msra.mxu0 0.0
    %416 = vmatprep.subr.mxu0 0.0
    %417 = vmatpush1.msra.mxu0 0.0
    %418 = vmatprep.subr.mxu0 0.0
    %419 = vmatpush1.msra.mxu0 0.0
    %420 = vmatprep.subr.mxu0 0.0
    %421 = vmatpush1.msra.mxu0 0.0
    %422 = vmatprep.subr.mxu0 0.0
    %423 = vmatpush1.msra.mxu0 0.0
    %424 = vmatprep.subr.mxu0 0.0
    %425 = vmatpush1.msra.mxu0 0.0
    %426 = vmatprep.subr.mxu0 0.0
    %427 = vmatpush1.msra.mxu0 0.0
    %428 = vmatprep.subr.mxu0 0.0
    %429 = vmatpush1.msra.mxu0 0.0
    %430 = vmatprep.subr.mxu0 0.0
    %431 = vmatpush1.msra.mxu0 0.0
    %432 = vmatprep.subr.mxu0 0.0
    %433 = vmatpush1.msra.mxu0 0.0
    %434 = vmatprep.subr.mxu0 0.0
    %435 = vmatpush1.msra.mxu0 0.0
    %436 = vmatprep.mubr.f32.mxu0 0.0
    %437 = vmatmul.mubr.f32.gmra.mrb[0].mxu0 %v370
    %v438 = vpop.f32.mrb[0].mxu0
    %v439 = vadd.f32 0.0, %v438
    %v440 = vpop.f32.mrb[0].mxu0
    %441 = vdwg.mxu0
    %442 = vrot.lane.b32.xlu0 %v182, 64
    %v443 = vpop.permute.xlu0 %442
    %v446 = vsel %vm190, %v365, 0
    %448 = vmatprep.subr.mxu0 0.0
    %449 = vmatpush1.msra.mxu0 %v443
    %450 = vmatprep.subr.mxu0 0.0
    %451 = vmatpush1.msra.mxu0 0.0
    %452 = vmatprep.subr.mxu0 0.0
    %453 = vmatpush1.msra.mxu0 0.0
    %454 = vmatprep.subr.mxu0 0.0
    %455 = vmatpush1.msra.mxu0 0.0
    %456 = vmatprep.subr.mxu0 0.0
    %457 = vmatpush1.msra.mxu0 0.0
    %458 = vmatprep.subr.mxu0 0.0
    %459 = vmatpush1.msra.mxu0 0.0
    %460 = vmatprep.subr.mxu0 0.0
    %461 = vmatpush1.msra.mxu0 0.0
    %462 = vmatprep.subr.mxu0 0.0
    %463 = vmatpush1.msra.mxu0 0.0
    %464 = vmatprep.subr.mxu0 0.0
    %465 = vmatpush1.msra.mxu0 0.0
    %466 = vmatprep.subr.mxu0 0.0
    %467 = vmatpush1.msra.mxu0 0.0
    %468 = vmatprep.subr.mxu0 0.0
    %469 = vmatpush1.msra.mxu0 0.0
    %470 = vmatprep.subr.mxu0 0.0
    %471 = vmatpush1.msra.mxu0 0.0
    %472 = vmatprep.subr.mxu0 0.0
    %473 = vmatpush1.msra.mxu0 0.0
    %474 = vmatprep.subr.mxu0 0.0
    %475 = vmatpush1.msra.mxu0 0.0
    %476 = vmatprep.subr.mxu0 0.0
    %477 = vmatpush1.msra.mxu0 0.0
    %478 = vmatprep.subr.mxu0 0.0
    %479 = vmatpush1.msra.mxu0 0.0
    %480 = vmatprep.subr.mxu0 0.0
    %481 = vmatpush1.msra.mxu0 0.0
    %482 = vmatprep.subr.mxu0 0.0
    %483 = vmatpush1.msra.mxu0 0.0
    %484 = vmatprep.subr.mxu0 0.0
    %485 = vmatpush1.msra.mxu0 0.0
    %486 = vmatprep.subr.mxu0 0.0
    %487 = vmatpush1.msra.mxu0 0.0
    %488 = vmatprep.subr.mxu0 0.0
    %489 = vmatpush1.msra.mxu0 0.0
    %490 = vmatprep.subr.mxu0 0.0
    %491 = vmatpush1.msra.mxu0 0.0
    %492 = vmatprep.subr.mxu0 0.0
    %493 = vmatpush1.msra.mxu0 0.0
    %494 = vmatprep.subr.mxu0 0.0
    %495 = vmatpush1.msra.mxu0 0.0
    %496 = vmatprep.subr.mxu0 0.0
    %497 = vmatpush1.msra.mxu0 0.0
    %498 = vmatprep.subr.mxu0 0.0
    %499 = vmatpush1.msra.mxu0 0.0
    %500 = vmatprep.subr.mxu0 0.0
    %501 = vmatpush1.msra.mxu0 0.0
    %502 = vmatprep.subr.mxu0 0.0
    %503 = vmatpush1.msra.mxu0 0.0
    %504 = vmatprep.subr.mxu0 0.0
    %505 = vmatpush1.msra.mxu0 0.0
    %506 = vmatprep.subr.mxu0 0.0
    %507 = vmatpush1.msra.mxu0 0.0
    %508 = vmatprep.subr.mxu0 0.0
    %509 = vmatpush1.msra.mxu0 0.0
    %510 = vmatprep.subr.mxu0 0.0
    %511 = vmatpush1.msra.mxu0 0.0
    %512 = vmatprep.mubr.f32.mxu0 0.0
    %513 = vmatmul.mubr.f32.gmra.mrb[0].mxu0 %v446
    %v514 = vpop.f32.mrb[0].mxu0
    %v515 = vadd.f32 0.0, %v514
    %v516 = vpop.f32.mrb[0].mxu0
    %517 = vdwg.mxu0
    %518 = vrot.lane.b32.xlu0 %v185, 120
    %v519 = vpop.permute.xlu0 %518
    %520 = vrot.lane.b32.xlu0 %v177, 88
    %v521 = vpop.permute.xlu0 %520
    %v522 = vsel %vm190, %v519, 0
    %v524 = vsel %vm190, %v521, 0
    %526 = vmatprep.subr.mxu0 0.0
    %527 = vmatpush1.xpose.msra.mxu0 %v524
    %528 = vmatprep.subr.mxu0 0.0
    %529 = vmatpush1.xpose.msra.mxu0 0.0
    %530 = vmatprep.subr.mxu0 0.0
    %531 = vmatpush1.xpose.msra.mxu0 0.0
    %532 = vmatprep.subr.mxu0 0.0
    %533 = vmatpush1.xpose.msra.mxu0 0.0
    %534 = vmatprep.subr.mxu0 0.0
    %535 = vmatpush1.xpose.msra.mxu0 0.0
    %536 = vmatprep.subr.mxu0 0.0
    %537 = vmatpush1.xpose.msra.mxu0 0.0
    %538 = vmatprep.subr.mxu0 0.0
    %539 = vmatpush1.xpose.msra.mxu0 0.0
    %540 = vmatprep.subr.mxu0 0.0
    %541 = vmatpush1.xpose.msra.mxu0 0.0
    %542 = vmatprep.subr.mxu0 0.0
    %543 = vmatpush1.xpose.msra.mxu0 0.0
    %544 = vmatprep.subr.mxu0 0.0
    %545 = vmatpush1.xpose.msra.mxu0 0.0
    %546 = vmatprep.subr.mxu0 0.0
    %547 = vmatpush1.xpose.msra.mxu0 0.0
    %548 = vmatprep.subr.mxu0 0.0
    %549 = vmatpush1.xpose.msra.mxu0 0.0
    %550 = vmatprep.subr.mxu0 0.0
    %551 = vmatpush1.xpose.msra.mxu0 0.0
    %552 = vmatprep.subr.mxu0 0.0
    %553 = vmatpush1.xpose.msra.mxu0 0.0
    %554 = vmatprep.subr.mxu0 0.0
    %555 = vmatpush1.xpose.msra.mxu0 0.0
    %556 = vmatprep.subr.mxu0 0.0
    %557 = vmatpush1.xpose.msra.mxu0 0.0
    %558 = vmatprep.subr.mxu0 0.0
    %559 = vmatpush1.xpose.msra.mxu0 0.0
    %560 = vmatprep.subr.mxu0 0.0
    %561 = vmatpush1.xpose.msra.mxu0 0.0
    %562 = vmatprep.subr.mxu0 0.0
    %563 = vmatpush1.xpose.msra.mxu0 0.0
    %564 = vmatprep.subr.mxu0 0.0
    %565 = vmatpush1.xpose.msra.mxu0 0.0
    %566 = vmatprep.subr.mxu0 0.0
    %567 = vmatpush1.xpose.msra.mxu0 0.0
    %568 = vmatprep.subr.mxu0 0.0
    %569 = vmatpush1.xpose.msra.mxu0 0.0
    %570 = vmatprep.subr.mxu0 0.0
    %571 = vmatpush1.xpose.msra.mxu0 0.0
    %572 = vmatprep.subr.mxu0 0.0
    %573 = vmatpush1.xpose.msra.mxu0 0.0
    %574 = vmatprep.subr.mxu0 0.0
    %575 = vmatpush1.xpose.msra.mxu0 0.0
    %576 = vmatprep.subr.mxu0 0.0
    %577 = vmatpush1.xpose.msra.mxu0 0.0
    %578 = vmatprep.subr.mxu0 0.0
    %579 = vmatpush1.xpose.msra.mxu0 0.0
    %580 = vmatprep.subr.mxu0 0.0
    %581 = vmatpush1.xpose.msra.mxu0 0.0
    %582 = vmatprep.subr.mxu0 0.0
    %583 = vmatpush1.xpose.msra.mxu0 0.0
    %584 = vmatprep.subr.mxu0 0.0
    %585 = vmatpush1.xpose.msra.mxu0 0.0
    %586 = vmatprep.subr.mxu0 0.0
    %587 = vmatpush1.xpose.msra.mxu0 0.0
    %588 = vmatprep.subr.mxu0 0.0
    %589 = vmatpush1.xpose.msra.mxu0 0.0
    %590 = vmatprep.mubr.f32.mxu0 0.0
    %591 = vmatmul.mubr.f32.gmra.mrb[0].mxu0 %v522
    %v592 = vpop.f32.mrb[0].mxu0
    %v593 = vadd.f32 0.0, %v592
    %v594 = vpop.f32.mrb[0].mxu0
    %595 = vdwg.mxu0
    %596 = vrot.lane.b32.xlu0 %v186, 120
    %v597 = vpop.permute.xlu0 %596
    %598 = vrot.lane.b32.xlu0 %v182, 88
    %v599 = vpop.permute.xlu0 %598
    %v600 = vsel %vm190, %v597, 0
    %v602 = vsel %vm190, %v599, 0
    %604 = vmatprep.subr.mxu0 0.0
    %605 = vmatpush1.xpose.msra.mxu0 %v602
    %606 = vmatprep.subr.mxu0 0.0
    %607 = vmatpush1.xpose.msra.mxu0 0.0
    %608 = vmatprep.subr.mxu0 0.0
    %609 = vmatpush1.xpose.msra.mxu0 0.0
    %610 = vmatprep.subr.mxu0 0.0
    %611 = vmatpush1.xpose.msra.mxu0 0.0
    %612 = vmatprep.subr.mxu0 0.0
    %613 = vmatpush1.xpose.msra.mxu0 0.0
    %614 = vmatprep.subr.mxu0 0.0
    %615 = vmatpush1.xpose.msra.mxu0 0.0
    %616 = vmatprep.subr.mxu0 0.0
    %617 = vmatpush1.xpose.msra.mxu0 0.0
    %618 = vmatprep.subr.mxu0 0.0
    %619 = vmatpush1.xpose.msra.mxu0 0.0
    %620 = vmatprep.subr.mxu0 0.0
    %621 = vmatpush1.xpose.msra.mxu0 0.0
    %622 = vmatprep.subr.mxu0 0.0
    %623 = vmatpush1.xpose.msra.mxu0 0.0
    %624 = vmatprep.subr.mxu0 0.0
    %625 = vmatpush1.xpose.msra.mxu0 0.0
    %626 = vmatprep.subr.mxu0 0.0
    %627 = vmatpush1.xpose.msra.mxu0 0.0
    %628 = vmatprep.subr.mxu0 0.0
    %629 = vmatpush1.xpose.msra.mxu0 0.0
    %630 = vmatprep.subr.mxu0 0.0
    %631 = vmatpush1.xpose.msra.mxu0 0.0
    %632 = vmatprep.subr.mxu0 0.0
    %633 = vmatpush1.xpose.msra.mxu0 0.0
    %634 = vmatprep.subr.mxu0 0.0
    %635 = vmatpush1.xpose.msra.mxu0 0.0
    %636 = vmatprep.subr.mxu0 0.0
    %637 = vmatpush1.xpose.msra.mxu0 0.0
    %638 = vmatprep.subr.mxu0 0.0
    %639 = vmatpush1.xpose.msra.mxu0 0.0
    %640 = vmatprep.subr.mxu0 0.0
    %641 = vmatpush1.xpose.msra.mxu0 0.0
    %642 = vmatprep.subr.mxu0 0.0
    %643 = vmatpush1.xpose.msra.mxu0 0.0
    %644 = vmatprep.subr.mxu0 0.0
    %645 = vmatpush1.xpose.msra.mxu0 0.0
    %646 = vmatprep.subr.mxu0 0.0
    %647 = vmatpush1.xpose.msra.mxu0 0.0
    %648 = vmatprep.subr.mxu0 0.0
    %649 = vmatpush1.xpose.msra.mxu0 0.0
    %650 = vmatprep.subr.mxu0 0.0
    %651 = vmatpush1.xpose.msra.mxu0 0.0
    %652 = vmatprep.subr.mxu0 0.0
    %653 = vmatpush1.xpose.msra.mxu0 0.0
    %654 = vmatprep.subr.mxu0 0.0
    %655 = vmatpush1.xpose.msra.mxu0 0.0
    %656 = vmatprep.subr.mxu0 0.0
    %657 = vmatpush1.xpose.msra.mxu0 0.0
    %658 = vmatprep.subr.mxu0 0.0
    %659 = vmatpush1.xpose.msra.mxu0 0.0
    %660 = vmatprep.subr.mxu0 0.0
    %661 = vmatpush1.xpose.msra.mxu0 0.0
    %662 = vmatprep.subr.mxu0 0.0
    %663 = vmatpush1.xpose.msra.mxu0 0.0
    %664 = vmatprep.subr.mxu0 0.0
    %665 = vmatpush1.xpose.msra.mxu0 0.0
    %666 = vmatprep.subr.mxu0 0.0
    %667 = vmatpush1.xpose.msra.mxu0 0.0
    %668 = vmatprep.mubr.f32.mxu0 0.0
    %669 = vmatmul.mubr.f32.gmra.mrb[0].mxu0 %v600
    %v670 = vpop.f32.mrb[0].mxu0
    %v671 = vadd.f32 0.0, %v670
    %v672 = vpop.f32.mrb[0].mxu0
    %673 = vdwg.mxu0
    %v674 = vsel %vm190, %v593, -inf
    %675 = vmax.xlane.f32.xlu0 %v674
    %v676 = vpop.xlane.xlu0 %675
    %v677 = vsel %vm190, %v671, -inf
    %678 = vmax.xlane.f32.xlu0 %v677
    %v679 = vpop.xlane.xlu0 %678
    %v680 = vsub.f32 %v593, %v676
    %v681 = vsub.f32 %v671, %v679
    %v682 = vmul.f32 %v680, 1.442695
    %v683 = vpow.pop %v682
    %v684 = vmul.f32 %v681, 1.442695
    %v685 = vpow.pop %v684
    %v686 = vsel %vm190, %v683, 0.0
    %687 = vadd.xlane.f32.xlu0 %v686
    %v688 = vpop.xlane.xlu0 %687
    %v689 = vsel %vm190, %v685, 0.0
    %690 = vadd.xlane.f32.xlu0 %v689
    %v691 = vpop.xlane.xlu0 %690
    %v692 = vrcp.pop %v688
    %v693 = vrcp.pop %v691
    %v694 = vmul.f32 %v683, %v692
    %v695 = vmul.f32 %v685, %v693
    %696 = vrot.lane.b32.xlu0 %v177, 56
    %v697 = vpop.permute.xlu0 %696
    %v700 = vsel %vm190, %v694, 0
    %702 = vmatprep.subr.mxu0 0.0
    %703 = vmatpush1.msra.mxu0 %v697
    %704 = vmatprep.subr.mxu0 0.0
    %705 = vmatpush1.msra.mxu0 0.0
    %706 = vmatprep.subr.mxu0 0.0
    %707 = vmatpush1.msra.mxu0 0.0
    %708 = vmatprep.subr.mxu0 0.0
    %709 = vmatpush1.msra.mxu0 0.0
    %710 = vmatprep.subr.mxu0 0.0
    %711 = vmatpush1.msra.mxu0 0.0
    %712 = vmatprep.subr.mxu0 0.0
    %713 = vmatpush1.msra.mxu0 0.0
    %714 = vmatprep.subr.mxu0 0.0
    %715 = vmatpush1.msra.mxu0 0.0
    %716 = vmatprep.subr.mxu0 0.0
    %717 = vmatpush1.msra.mxu0 0.0
    %718 = vmatprep.subr.mxu0 0.0
    %719 = vmatpush1.msra.mxu0 0.0
    %720 = vmatprep.subr.mxu0 0.0
    %721 = vmatpush1.msra.mxu0 0.0
    %722 = vmatprep.subr.mxu0 0.0
    %723 = vmatpush1.msra.mxu0 0.0
    %724 = vmatprep.subr.mxu0 0.0
    %725 = vmatpush1.msra.mxu0 0.0
    %726 = vmatprep.subr.mxu0 0.0
    %727 = vmatpush1.msra.mxu0 0.0
    %728 = vmatprep.subr.mxu0 0.0
    %729 = vmatpush1.msra.mxu0 0.0
    %730 = vmatprep.subr.mxu0 0.0
    %731 = vmatpush1.msra.mxu0 0.0
    %732 = vmatprep.subr.mxu0 0.0
    %733 = vmatpush1.msra.mxu0 0.0
    %734 = vmatprep.subr.mxu0 0.0
    %735 = vmatpush1.msra.mxu0 0.0
    %736 = vmatprep.subr.mxu0 0.0
    %737 = vmatpush1.msra.mxu0 0.0
    %738 = vmatprep.subr.mxu0 0.0
    %739 = vmatpush1.msra.mxu0 0.0
    %740 = vmatprep.subr.mxu0 0.0
    %741 = vmatpush1.msra.mxu0 0.0
    %742 = vmatprep.subr.mxu0 0.0
    %743 = vmatpush1.msra.mxu0 0.0
    %744 = vmatprep.subr.mxu0 0.0
    %745 = vmatpush1.msra.mxu0 0.0
    %746 = vmatprep.subr.mxu0 0.0
    %747 = vmatpush1.msra.mxu0 0.0
    %748 = vmatprep.subr.mxu0 0.0
    %749 = vmatpush1.msra.mxu0 0.0
    %750 = vmatprep.subr.mxu0 0.0
    %751 = vmatpush1.msra.mxu0 0.0
    %752 = vmatprep.subr.mxu0 0.0
    %753 = vmatpush1.msra.mxu0 0.0
    %754 = vmatprep.subr.mxu0 0.0
    %755 = vmatpush1.msra.mxu0 0.0
    %756 = vmatprep.subr.mxu0 0.0
    %757 = vmatpush1.msra.mxu0 0.0
    %758 = vmatprep.subr.mxu0 0.0
    %759 = vmatpush1.msra.mxu0 0.0
    %760 = vmatprep.subr.mxu0 0.0
    %761 = vmatpush1.msra.mxu0 0.0
    %762 = vmatprep.subr.mxu0 0.0
    %763 = vmatpush1.msra.mxu0 0.0
    %764 = vmatprep.subr.mxu0 0.0
    %765 = vmatpush1.msra.mxu0 0.0
    %766 = vmatprep.mubr.f32.mxu0 0.0
    %767 = vmatmul.mubr.f32.gmra.mrb[0].mxu0 %v700
    %v768 = vpop.f32.mrb[0].mxu0
    %v769 = vadd.f32 0.0, %v768
    %v770 = vpop.f32.mrb[0].mxu0
    %771 = vdwg.mxu0
    %772 = vrot.lane.b32.xlu0 %v182, 56
    %v773 = vpop.permute.xlu0 %772
    %v776 = vsel %vm190, %v695, 0
    %778 = vmatprep.subr.mxu0 0.0
    %779 = vmatpush1.msra.mxu0 %v773
    %780 = vmatprep.subr.mxu0 0.0
    %781 = vmatpush1.msra.mxu0 0.0
    %782 = vmatprep.subr.mxu0 0.0
    %783 = vmatpush1.msra.mxu0 0.0
    %784 = vmatprep.subr.mxu0 0.0
    %785 = vmatpush1.msra.mxu0 0.0
    %786 = vmatprep.subr.mxu0 0.0
    %787 = vmatpush1.msra.mxu0 0.0
    %788 = vmatprep.subr.mxu0 0.0
    %789 = vmatpush1.msra.mxu0 0.0
    %790 = vmatprep.subr.mxu0 0.0
    %791 = vmatpush1.msra.mxu0 0.0
    %792 = vmatprep.subr.mxu0 0.0
    %793 = vmatpush1.msra.mxu0 0.0
    %794 = vmatprep.subr.mxu0 0.0
    %795 = vmatpush1.msra.mxu0 0.0
    %796 = vmatprep.subr.mxu0 0.0
    %797 = vmatpush1.msra.mxu0 0.0
    %798 = vmatprep.subr.mxu0 0.0
    %799 = vmatpush1.msra.mxu0 0.0
    %800 = vmatprep.subr.mxu0 0.0
    %801 = vmatpush1.msra.mxu0 0.0
    %802 = vmatprep.subr.mxu0 0.0
    %803 = vmatpush1.msra.mxu0 0.0
    %804 = vmatprep.subr.mxu0 0.0
    %805 = vmatpush1.msra.mxu0 0.0
    %806 = vmatprep.subr.mxu0 0.0
    %807 = vmatpush1.msra.mxu0 0.0
    %808 = vmatprep.subr.mxu0 0.0
    %809 = vmatpush1.msra.mxu0 0.0
    %810 = vmatprep.subr.mxu0 0.0
    %811 = vmatpush1.msra.mxu0 0.0
    %812 = vmatprep.subr.mxu0 0.0
    %813 = vmatpush1.msra.mxu0 0.0
    %814 = vmatprep.subr.mxu0 0.0
    %815 = vmatpush1.msra.mxu0 0.0
    %816 = vmatprep.subr.mxu0 0.0
    %817 = vmatpush1.msra.mxu0 0.0
    %818 = vmatprep.subr.mxu0 0.0
    %819 = vmatpush1.msra.mxu0 0.0
    %820 = vmatprep.subr.mxu0 0.0
    %821 = vmatpush1.msra.mxu0 0.0
    %822 = vmatprep.subr.mxu0 0.0
    %823 = vmatpush1.msra.mxu0 0.0
    %824 = vmatprep.subr.mxu0 0.0
    %825 = vmatpush1.msra.mxu0 0.0
    %826 = vmatprep.subr.mxu0 0.0
    %827 = vmatpush1.msra.mxu0 0.0
    %828 = vmatprep.subr.mxu0 0.0
    %829 = vmatpush1.msra.mxu0 0.0
    %830 = vmatprep.subr.mxu0 0.0
    %831 = vmatpush1.msra.mxu0 0.0
    %832 = vmatprep.subr.mxu0 0.0
    %833 = vmatpush1.msra.mxu0 0.0
    %834 = vmatprep.subr.mxu0 0.0
    %835 = vmatpush1.msra.mxu0 0.0
    %836 = vmatprep.subr.mxu0 0.0
    %837 = vmatpush1.msra.mxu0 0.0
    %838 = vmatprep.subr.mxu0 0.0
    %839 = vmatpush1.msra.mxu0 0.0
    %840 = vmatprep.subr.mxu0 0.0
    %841 = vmatpush1.msra.mxu0 0.0
    %842 = vmatprep.mubr.f32.mxu0 0.0
    %843 = vmatmul.mubr.f32.gmra.mrb[0].mxu0 %v776
    %v844 = vpop.f32.mrb[0].mxu0
    %v845 = vadd.f32 0.0, %v844
    %v846 = vpop.f32.mrb[0].mxu0
    %847 = vdwg.mxu0
    %848 = vrot.lane.b32.xlu0 %v185, 112
    %v849 = vpop.permute.xlu0 %848
    %850 = vrot.lane.b32.xlu0 %v177, 80
    %v851 = vpop.permute.xlu0 %850
    %v852 = vsel %vm190, %v849, 0
    %v854 = vsel %vm190, %v851, 0
    %856 = vmatprep.subr.mxu0 0.0
    %857 = vmatpush1.xpose.msra.mxu0 %v854
    %858 = vmatprep.subr.mxu0 0.0
    %859 = vmatpush1.xpose.msra.mxu0 0.0
    %860 = vmatprep.subr.mxu0 0.0
    %861 = vmatpush1.xpose.msra.mxu0 0.0
    %862 = vmatprep.subr.mxu0 0.0
    %863 = vmatpush1.xpose.msra.mxu0 0.0
    %864 = vmatprep.subr.mxu0 0.0
    %865 = vmatpush1.xpose.msra.mxu0 0.0
    %866 = vmatprep.subr.mxu0 0.0
    %867 = vmatpush1.xpose.msra.mxu0 0.0
    %868 = vmatprep.subr.mxu0 0.0
    %869 = vmatpush1.xpose.msra.mxu0 0.0
    %870 = vmatprep.subr.mxu0 0.0
    %871 = vmatpush1.xpose.msra.mxu0 0.0
    %872 = vmatprep.subr.mxu0 0.0
    %873 = vmatpush1.xpose.msra.mxu0 0.0
    %874 = vmatprep.subr.mxu0 0.0
    %875 = vmatpush1.xpose.msra.mxu0 0.0
    %876 = vmatprep.subr.mxu0 0.0
    %877 = vmatpush1.xpose.msra.mxu0 0.0
    %878 = vmatprep.subr.mxu0 0.0
    %879 = vmatpush1.xpose.msra.mxu0 0.0
    %880 = vmatprep.subr.mxu0 0.0
    %881 = vmatpush1.xpose.msra.mxu0 0.0
    %882 = vmatprep.subr.mxu0 0.0
    %883 = vmatpush1.xpose.msra.mxu0 0.0
    %884 = vmatprep.subr.mxu0 0.0
    %885 = vmatpush1.xpose.msra.mxu0 0.0
    %886 = vmatprep.subr.mxu0 0.0
    %887 = vmatpush1.xpose.msra.mxu0 0.0
    %888 = vmatprep.subr.mxu0 0.0
    %889 = vmatpush1.xpose.msra.mxu0 0.0
    %890 = vmatprep.subr.mxu0 0.0
    %891 = vmatpush1.xpose.msra.mxu0 0.0
    %892 = vmatprep.subr.mxu0 0.0
    %893 = vmatpush1.xpose.msra.mxu0 0.0
    %894 = vmatprep.subr.mxu0 0.0
    %895 = vmatpush1.xpose.msra.mxu0 0.0
    %896 = vmatprep.subr.mxu0 0.0
    %897 = vmatpush1.xpose.msra.mxu0 0.0
    %898 = vmatprep.subr.mxu0 0.0
    %899 = vmatpush1.xpose.msra.mxu0 0.0
    %900 = vmatprep.subr.mxu0 0.0
    %901 = vmatpush1.xpose.msra.mxu0 0.0
    %902 = vmatprep.subr.mxu0 0.0
    %903 = vmatpush1.xpose.msra.mxu0 0.0
    %904 = vmatprep.subr.mxu0 0.0
    %905 = vmatpush1.xpose.msra.mxu0 0.0
    %906 = vmatprep.subr.mxu0 0.0
    %907 = vmatpush1.xpose.msra.mxu0 0.0
    %908 = vmatprep.subr.mxu0 0.0
    %909 = vmatpush1.xpose.msra.mxu0 0.0
    %910 = vmatprep.subr.mxu0 0.0
    %911 = vmatpush1.xpose.msra.mxu0 0.0
    %912 = vmatprep.subr.mxu0 0.0
    %913 = vmatpush1.xpose.msra.mxu0 0.0
    %914 = vmatprep.subr.mxu0 0.0
    %915 = vmatpush1.xpose.msra.mxu0 0.0
    %916 = vmatprep.subr.mxu0 0.0
    %917 = vmatpush1.xpose.msra.mxu0 0.0
    %918 = vmatprep.subr.mxu0 0.0
    %919 = vmatpush1.xpose.msra.mxu0 0.0
    %920 = vmatprep.mubr.f32.mxu0 0.0
    %921 = vmatmul.mubr.f32.gmra.mrb[0].mxu0 %v852
    %v922 = vpop.f32.mrb[0].mxu0
    %v923 = vadd.f32 0.0, %v922
    %v924 = vpop.f32.mrb[0].mxu0
    %925 = vdwg.mxu0
    %926 = vrot.lane.b32.xlu0 %v186, 112
    %v927 = vpop.permute.xlu0 %926
    %928 = vrot.lane.b32.xlu0 %v182, 80
    %v929 = vpop.permute.xlu0 %928
    %v930 = vsel %vm190, %v927, 0
    %v932 = vsel %vm190, %v929, 0
    %934 = vmatprep.subr.mxu0 0.0
    %935 = vmatpush1.xpose.msra.mxu0 %v932
    %936 = vmatprep.subr.mxu0 0.0
    %937 = vmatpush1.xpose.msra.mxu0 0.0
    %938 = vmatprep.subr.mxu0 0.0
    %939 = vmatpush1.xpose.msra.mxu0 0.0
    %940 = vmatprep.subr.mxu0 0.0
    %941 = vmatpush1.xpose.msra.mxu0 0.0
    %942 = vmatprep.subr.mxu0 0.0
    %943 = vmatpush1.xpose.msra.mxu0 0.0
    %944 = vmatprep.subr.mxu0 0.0
    %945 = vmatpush1.xpose.msra.mxu0 0.0
    %946 = vmatprep.subr.mxu0 0.0
    %947 = vmatpush1.xpose.msra.mxu0 0.0
    %948 = vmatprep.subr.mxu0 0.0
    %949 = vmatpush1.xpose.msra.mxu0 0.0
    %950 = vmatprep.subr.mxu0 0.0
    %951 = vmatpush1.xpose.msra.mxu0 0.0
    %952 = vmatprep.subr.mxu0 0.0
    %953 = vmatpush1.xpose.msra.mxu0 0.0
    %954 = vmatprep.subr.mxu0 0.0
    %955 = vmatpush1.xpose.msra.mxu0 0.0
    %956 = vmatprep.subr.mxu0 0.0
    %957 = vmatpush1.xpose.msra.mxu0 0.0
    %958 = vmatprep.subr.mxu0 0.0
    %959 = vmatpush1.xpose.msra.mxu0 0.0
    %960 = vmatprep.subr.mxu0 0.0
    %961 = vmatpush1.xpose.msra.mxu0 0.0
    %962 = vmatprep.subr.mxu0 0.0
    %963 = vmatpush1.xpose.msra.mxu0 0.0
    %964 = vmatprep.subr.mxu0 0.0
    %965 = vmatpush1.xpose.msra.mxu0 0.0
    %966 = vmatprep.subr.mxu0 0.0
    %967 = vmatpush1.xpose.msra.mxu0 0.0
    %968 = vmatprep.subr.mxu0 0.0
    %969 = vmatpush1.xpose.msra.mxu0 0.0
    %970 = vmatprep.subr.mxu0 0.0
    %971 = vmatpush1.xpose.msra.mxu0 0.0
    %972 = vmatprep.subr.mxu0 0.0
    %973 = vmatpush1.xpose.msra.mxu0 0.0
    %974 = vmatprep.subr.mxu0 0.0
    %975 = vmatpush1.xpose.msra.mxu0 0.0
    %976 = vmatprep.subr.mxu0 0.0
    %977 = vmatpush1.xpose.msra.mxu0 0.0
    %978 = vmatprep.subr.mxu0 0.0
    %979 = vmatpush1.xpose.msra.mxu0 0.0
    %980 = vmatprep.subr.mxu0 0.0
    %981 = vmatpush1.xpose.msra.mxu0 0.0
    %982 = vmatprep.subr.mxu0 0.0
    %983 = vmatpush1.xpose.msra.mxu0 0.0
    %984 = vmatprep.subr.mxu0 0.0
    %985 = vmatpush1.xpose.msra.mxu0 0.0
    %986 = vmatprep.subr.mxu0 0.0
    %987 = vmatpush1.xpose.msra.mxu0 0.0
    %988 = vmatprep.subr.mxu0 0.0
    %989 = vmatpush1.xpose.msra.mxu0 0.0
    %990 = vmatprep.subr.mxu0 0.0
    %991 = vmatpush1.xpose.msra.mxu0 0.0
    %992 = vmatprep.subr.mxu0 0.0
    %993 = vmatpush1.xpose.msra.mxu0 0.0
    %994 = vmatprep.subr.mxu0 0.0
    %995 = vmatpush1.xpose.msra.mxu0 0.0
    %996 = vmatprep.subr.mxu0 0.0
    %997 = vmatpush1.xpose.msra.mxu0 0.0
    %998 = vmatprep.mubr.f32.mxu0 0.0
    %999 = vmatmul.mubr.f32.gmra.mrb[0].mxu0 %v930
    %v1000 = vpop.f32.mrb[0].mxu0
    %v1001 = vadd.f32 0.0, %v1000
    %v1002 = vpop.f32.mrb[0].mxu0
    %1003 = vdwg.mxu0
    %v1004 = vsel %vm190, %v923, -inf
    %1005 = vmax.xlane.f32.xlu0 %v1004
    %v1006 = vpop.xlane.xlu0 %1005
    %v1007 = vsel %vm190, %v1001, -inf
    %1008 = vmax.xlane.f32.xlu0 %v1007
    %v1009 = vpop.xlane.xlu0 %1008
    %v1010 = vsub.f32 %v923, %v1006
    %v1011 = vsub.f32 %v1001, %v1009
    %v1012 = vmul.f32 %v1010, 1.442695
    %v1013 = vpow.pop %v1012
    %v1014 = vmul.f32 %v1011, 1.442695
    %v1015 = vpow.pop %v1014
    %v1016 = vsel %vm190, %v1013, 0.0
    %1017 = vadd.xlane.f32.xlu0 %v1016
    %v1018 = vpop.xlane.xlu0 %1017
    %v1019 = vsel %vm190, %v1015, 0.0
    %1020 = vadd.xlane.f32.xlu0 %v1019
    %v1021 = vpop.xlane.xlu0 %1020
    %v1022 = vrcp.pop %v1018
    %v1023 = vrcp.pop %v1021
    %v1024 = vmul.f32 %v1013, %v1022
    %v1025 = vmul.f32 %v1015, %v1023
    %1026 = vrot.lane.b32.xlu0 %v177, 48
    %v1027 = vpop.permute.xlu0 %1026
    %v1030 = vsel %vm190, %v1024, 0
    %1032 = vmatprep.subr.mxu0 0.0
    %1033 = vmatpush1.msra.mxu0 %v1027
    %1034 = vmatprep.subr.mxu0 0.0
    %1035 = vmatpush1.msra.mxu0 0.0
    %1036 = vmatprep.subr.mxu0 0.0
    %1037 = vmatpush1.msra.mxu0 0.0
    %1038 = vmatprep.subr.mxu0 0.0
    %1039 = vmatpush1.msra.mxu0 0.0
    %1040 = vmatprep.subr.mxu0 0.0
    %1041 = vmatpush1.msra.mxu0 0.0
    %1042 = vmatprep.subr.mxu0 0.0
    %1043 = vmatpush1.msra.mxu0 0.0
    %1044 = vmatprep.subr.mxu0 0.0
    %1045 = vmatpush1.msra.mxu0 0.0
    %1046 = vmatprep.subr.mxu0 0.0
    %1047 = vmatpush1.msra.mxu0 0.0
    %1048 = vmatprep.subr.mxu0 0.0
    %1049 = vmatpush1.msra.mxu0 0.0
    %1050 = vmatprep.subr.mxu0 0.0
    %1051 = vmatpush1.msra.mxu0 0.0
    %1052 = vmatprep.subr.mxu0 0.0
    %1053 = vmatpush1.msra.mxu0 0.0
    %1054 = vmatprep.subr.mxu0 0.0
    %1055 = vmatpush1.msra.mxu0 0.0
    %1056 = vmatprep.subr.mxu0 0.0
    %1057 = vmatpush1.msra.mxu0 0.0
    %1058 = vmatprep.subr.mxu0 0.0
    %1059 = vmatpush1.msra.mxu0 0.0
    %1060 = vmatprep.subr.mxu0 0.0
    %1061 = vmatpush1.msra.mxu0 0.0
    %1062 = vmatprep.subr.mxu0 0.0
    %1063 = vmatpush1.msra.mxu0 0.0
    %1064 = vmatprep.subr.mxu0 0.0
    %1065 = vmatpush1.msra.mxu0 0.0
    %1066 = vmatprep.subr.mxu0 0.0
    %1067 = vmatpush1.msra.mxu0 0.0
    %1068 = vmatprep.subr.mxu0 0.0
    %1069 = vmatpush1.msra.mxu0 0.0
    %1070 = vmatprep.subr.mxu0 0.0
    %1071 = vmatpush1.msra.mxu0 0.0
    %1072 = vmatprep.subr.mxu0 0.0
    %1073 = vmatpush1.msra.mxu0 0.0
    %1074 = vmatprep.subr.mxu0 0.0
    %1075 = vmatpush1.msra.mxu0 0.0
    %1076 = vmatprep.subr.mxu0 0.0
    %1077 = vmatpush1.msra.mxu0 0.0
    %1078 = vmatprep.subr.mxu0 0.0
    %1079 = vmatpush1.msra.mxu0 0.0
    %1080 = vmatprep.subr.mxu0 0.0
    %1081 = vmatpush1.msra.mxu0 0.0
    %1082 = vmatprep.subr.mxu0 0.0
    %1083 = vmatpush1.msra.mxu0 0.0
    %1084 = vmatprep.subr.mxu0 0.0
    %1085 = vmatpush1.msra.mxu0 0.0
    %1086 = vmatprep.subr.mxu0 0.0
    %1087 = vmatpush1.msra.mxu0 0.0
    %1088 = vmatprep.subr.mxu0 0.0
    %1089 = vmatpush1.msra.mxu0 0.0
    %1090 = vmatprep.subr.mxu0 0.0
    %1091 = vmatpush1.msra.mxu0 0.0
    %1092 = vmatprep.subr.mxu0 0.0
    %1093 = vmatpush1.msra.mxu0 0.0
    %1094 = vmatprep.subr.mxu0 0.0
    %1095 = vmatpush1.msra.mxu0 0.0
    %1096 = vmatprep.mubr.f32.mxu0 0.0
    %1097 = vmatmul.mubr.f32.gmra.mrb[0].mxu0 %v1030
    %v1098 = vpop.f32.mrb[0].mxu0
    %v1099 = vadd.f32 0.0, %v1098
    %v1100 = vpop.f32.mrb[0].mxu0
    %1101 = vdwg.mxu0
    %1102 = vrot.lane.b32.xlu0 %v182, 48
    %v1103 = vpop.permute.xlu0 %1102
    %v1106 = vsel %vm190, %v1025, 0
    %1108 = vmatprep.subr.mxu0 0.0
    %1109 = vmatpush1.msra.mxu0 %v1103
    %1110 = vmatprep.subr.mxu0 0.0
    %1111 = vmatpush1.msra.mxu0 0.0
    %1112 = vmatprep.subr.mxu0 0.0
    %1113 = vmatpush1.msra.mxu0 0.0
    %1114 = vmatprep.subr.mxu0 0.0
    %1115 = vmatpush1.msra.mxu0 0.0
    %1116 = vmatprep.subr.mxu0 0.0
    %1117 = vmatpush1.msra.mxu0 0.0
    %1118 = vmatprep.subr.mxu0 0.0
    %1119 = vmatpush1.msra.mxu0 0.0
    %1120 = vmatprep.subr.mxu0 0.0
    %1121 = vmatpush1.msra.mxu0 0.0
    %1122 = vmatprep.subr.mxu0 0.0
    %1123 = vmatpush1.msra.mxu0 0.0
    %1124 = vmatprep.subr.mxu0 0.0
    %1125 = vmatpush1.msra.mxu0 0.0
    %1126 = vmatprep.subr.mxu0 0.0
    %1127 = vmatpush1.msra.mxu0 0.0
    %1128 = vmatprep.subr.mxu0 0.0
    %1129 = vmatpush1.msra.mxu0 0.0
    %1130 = vmatprep.subr.mxu0 0.0
    %1131 = vmatpush1.msra.mxu0 0.0
    %1132 = vmatprep.subr.mxu0 0.0
    %1133 = vmatpush1.msra.mxu0 0.0
    %1134 = vmatprep.subr.mxu0 0.0
    %1135 = vmatpush1.msra.mxu0 0.0
    %1136 = vmatprep.subr.mxu0 0.0
    %1137 = vmatpush1.msra.mxu0 0.0
    %1138 = vmatprep.subr.mxu0 0.0
    %1139 = vmatpush1.msra.mxu0 0.0
    %1140 = vmatprep.subr.mxu0 0.0
    %1141 = vmatpush1.msra.mxu0 0.0
    %1142 = vmatprep.subr.mxu0 0.0
    %1143 = vmatpush1.msra.mxu0 0.0
    %1144 = vmatprep.subr.mxu0 0.0
    %1145 = vmatpush1.msra.mxu0 0.0
    %1146 = vmatprep.subr.mxu0 0.0
    %1147 = vmatpush1.msra.mxu0 0.0
    %1148 = vmatprep.subr.mxu0 0.0
    %1149 = vmatpush1.msra.mxu0 0.0
    %1150 = vmatprep.subr.mxu0 0.0
    %1151 = vmatpush1.msra.mxu0 0.0
    %1152 = vmatprep.subr.mxu0 0.0
    %1153 = vmatpush1.msra.mxu0 0.0
    %1154 = vmatprep.subr.mxu0 0.0
    %1155 = vmatpush1.msra.mxu0 0.0
    %1156 = vmatprep.subr.mxu0 0.0
    %1157 = vmatpush1.msra.mxu0 0.0
    %1158 = vmatprep.subr.mxu0 0.0
    %1159 = vmatpush1.msra.mxu0 0.0
    %1160 = vmatprep.subr.mxu0 0.0
    %1161 = vmatpush1.msra.mxu0 0.0
    %1162 = vmatprep.subr.mxu0 0.0
    %1163 = vmatpush1.msra.mxu0 0.0
    %1164 = vmatprep.subr.mxu0 0.0
    %1165 = vmatpush1.msra.mxu0 0.0
    %1166 = vmatprep.subr.mxu0 0.0
    %1167 = vmatpush1.msra.mxu0 0.0
    %1168 = vmatprep.subr.mxu0 0.0
    %1169 = vmatpush1.msra.mxu0 0.0
    %1170 = vmatprep.subr.mxu0 0.0
    %1171 = vmatpush1.msra.mxu0 0.0
    %1172 = vmatprep.mubr.f32.mxu0 0.0
    %1173 = vmatmul.mubr.f32.gmra.mrb[0].mxu0 %v1106
    %v1174 = vpop.f32.mrb[0].mxu0
    %v1175 = vadd.f32 0.0, %v1174
    %v1176 = vpop.f32.mrb[0].mxu0
    %1177 = vdwg.mxu0
    %1178 = vrot.lane.b32.xlu0 %v185, 104
    %v1179 = vpop.permute.xlu0 %1178
    %1180 = vrot.lane.b32.xlu0 %v177, 72
    %v1181 = vpop.permute.xlu0 %1180
    %v1182 = vsel %vm190, %v1179, 0
    %v1184 = vsel %vm190, %v1181, 0
    %1186 = vmatprep.subr.mxu0 0.0
    %1187 = vmatpush1.xpose.msra.mxu0 %v1184
    %1188 = vmatprep.subr.mxu0 0.0
    %1189 = vmatpush1.xpose.msra.mxu0 0.0
    %1190 = vmatprep.subr.mxu0 0.0
    %1191 = vmatpush1.xpose.msra.mxu0 0.0
    %1192 = vmatprep.subr.mxu0 0.0
    %1193 = vmatpush1.xpose.msra.mxu0 0.0
    %1194 = vmatprep.subr.mxu0 0.0
    %1195 = vmatpush1.xpose.msra.mxu0 0.0
    %1196 = vmatprep.subr.mxu0 0.0
    %1197 = vmatpush1.xpose.msra.mxu0 0.0
    %1198 = vmatprep.subr.mxu0 0.0
    %1199 = vmatpush1.xpose.msra.mxu0 0.0
    %1200 = vmatprep.subr.mxu0 0.0
    %1201 = vmatpush1.xpose.msra.mxu0 0.0
    %1202 = vmatprep.subr.mxu0 0.0
    %1203 = vmatpush1.xpose.msra.mxu0 0.0
    %1204 = vmatprep.subr.mxu0 0.0
    %1205 = vmatpush1.xpose.msra.mxu0 0.0
    %1206 = vmatprep.subr.mxu0 0.0
    %1207 = vmatpush1.xpose.msra.mxu0 0.0
    %1208 = vmatprep.subr.mxu0 0.0
    %1209 = vmatpush1.xpose.msra.mxu0 0.0
    %1210 = vmatprep.subr.mxu0 0.0
    %1211 = vmatpush1.xpose.msra.mxu0 0.0
    %1212 = vmatprep.subr.mxu0 0.0
    %1213 = vmatpush1.xpose.msra.mxu0 0.0
    %1214 = vmatprep.subr.mxu0 0.0
    %1215 = vmatpush1.xpose.msra.mxu0 0.0
    %1216 = vmatprep.subr.mxu0 0.0
    %1217 = vmatpush1.xpose.msra.mxu0 0.0
    %1218 = vmatprep.subr.mxu0 0.0
    %1219 = vmatpush1.xpose.msra.mxu0 0.0
    %1220 = vmatprep.subr.mxu0 0.0
    %1221 = vmatpush1.xpose.msra.mxu0 0.0
    %1222 = vmatprep.subr.mxu0 0.0
    %1223 = vmatpush1.xpose.msra.mxu0 0.0
    %1224 = vmatprep.subr.mxu0 0.0
    %1225 = vmatpush1.xpose.msra.mxu0 0.0
    %1226 = vmatprep.subr.mxu0 0.0
    %1227 = vmatpush1.xpose.msra.mxu0 0.0
    %1228 = vmatprep.subr.mxu0 0.0
    %1229 = vmatpush1.xpose.msra.mxu0 0.0
    %1230 = vmatprep.subr.mxu0 0.0
    %1231 = vmatpush1.xpose.msra.mxu0 0.0
    %1232 = vmatprep.subr.mxu0 0.0
    %1233 = vmatpush1.xpose.msra.mxu0 0.0
    %1234 = vmatprep.subr.mxu0 0.0
    %1235 = vmatpush1.xpose.msra.mxu0 0.0
    %1236 = vmatprep.subr.mxu0 0.0
    %1237 = vmatpush1.xpose.msra.mxu0 0.0
    %1238 = vmatprep.subr.mxu0 0.0
    %1239 = vmatpush1.xpose.msra.mxu0 0.0
    %1240 = vmatprep.subr.mxu0 0.0
    %1241 = vmatpush1.xpose.msra.mxu0 0.0
    %1242 = vmatprep.subr.mxu0 0.0
    %1243 = vmatpush1.xpose.msra.mxu0 0.0
    %1244 = vmatprep.subr.mxu0 0.0
    %1245 = vmatpush1.xpose.msra.mxu0 0.0
    %1246 = vmatprep.subr.mxu0 0.0
    %1247 = vmatpush1.xpose.msra.mxu0 0.0
    %1248 = vmatprep.subr.mxu0 0.0
    %1249 = vmatpush1.xpose.msra.mxu0 0.0
    %1250 = vmatprep.mubr.f32.mxu0 0.0
    %1251 = vmatmul.mubr.f32.gmra.mrb[0].mxu0 %v1182
    %v1252 = vpop.f32.mrb[0].mxu0
    %v1253 = vadd.f32 0.0, %v1252
    %v1254 = vpop.f32.mrb[0].mxu0
    %1255 = vdwg.mxu0
    %1256 = vrot.lane.b32.xlu0 %v186, 104
    %v1257 = vpop.permute.xlu0 %1256
    %1258 = vrot.lane.b32.xlu0 %v182, 72
    %v1259 = vpop.permute.xlu0 %1258
    %v1260 = vsel %vm190, %v1257, 0
    %v1262 = vsel %vm190, %v1259, 0
    %1264 = vmatprep.subr.mxu0 0.0
    %1265 = vmatpush1.xpose.msra.mxu0 %v1262
    %1266 = vmatprep.subr.mxu0 0.0
    %1267 = vmatpush1.xpose.msra.mxu0 0.0
    %1268 = vmatprep.subr.mxu0 0.0
    %1269 = vmatpush1.xpose.msra.mxu0 0.0
    %1270 = vmatprep.subr.mxu0 0.0
    %1271 = vmatpush1.xpose.msra.mxu0 0.0
    %1272 = vmatprep.subr.mxu0 0.0
    %1273 = vmatpush1.xpose.msra.mxu0 0.0
    %1274 = vmatprep.subr.mxu0 0.0
    %1275 = vmatpush1.xpose.msra.mxu0 0.0
    %1276 = vmatprep.subr.mxu0 0.0
    %1277 = vmatpush1.xpose.msra.mxu0 0.0
    %1278 = vmatprep.subr.mxu0 0.0
    %1279 = vmatpush1.xpose.msra.mxu0 0.0
    %1280 = vmatprep.subr.mxu0 0.0
    %1281 = vmatpush1.xpose.msra.mxu0 0.0
    %1282 = vmatprep.subr.mxu0 0.0
    %1283 = vmatpush1.xpose.msra.mxu0 0.0
    %1284 = vmatprep.subr.mxu0 0.0
    %1285 = vmatpush1.xpose.msra.mxu0 0.0
    %1286 = vmatprep.subr.mxu0 0.0
    %1287 = vmatpush1.xpose.msra.mxu0 0.0
    %1288 = vmatprep.subr.mxu0 0.0
    %1289 = vmatpush1.xpose.msra.mxu0 0.0
    %1290 = vmatprep.subr.mxu0 0.0
    %1291 = vmatpush1.xpose.msra.mxu0 0.0
    %1292 = vmatprep.subr.mxu0 0.0
    %1293 = vmatpush1.xpose.msra.mxu0 0.0
    %1294 = vmatprep.subr.mxu0 0.0
    %1295 = vmatpush1.xpose.msra.mxu0 0.0
    %1296 = vmatprep.subr.mxu0 0.0
    %1297 = vmatpush1.xpose.msra.mxu0 0.0
    %1298 = vmatprep.subr.mxu0 0.0
    %1299 = vmatpush1.xpose.msra.mxu0 0.0
    %1300 = vmatprep.subr.mxu0 0.0
    %1301 = vmatpush1.xpose.msra.mxu0 0.0
    %1302 = vmatprep.subr.mxu0 0.0
    %1303 = vmatpush1.xpose.msra.mxu0 0.0
    %1304 = vmatprep.subr.mxu0 0.0
    %1305 = vmatpush1.xpose.msra.mxu0 0.0
    %1306 = vmatprep.subr.mxu0 0.0
    %1307 = vmatpush1.xpose.msra.mxu0 0.0
    %1308 = vmatprep.subr.mxu0 0.0
    %1309 = vmatpush1.xpose.msra.mxu0 0.0
    %1310 = vmatprep.subr.mxu0 0.0
    %1311 = vmatpush1.xpose.msra.mxu0 0.0
    %1312 = vmatprep.subr.mxu0 0.0
    %1313 = vmatpush1.xpose.msra.mxu0 0.0
    %1314 = vmatprep.subr.mxu0 0.0
    %1315 = vmatpush1.xpose.msra.mxu0 0.0
    %1316 = vmatprep.subr.mxu0 0.0
    %1317 = vmatpush1.xpose.msra.mxu0 0.0
    %1318 = vmatprep.subr.mxu0 0.0
    %1319 = vmatpush1.xpose.msra.mxu0 0.0
    %1320 = vmatprep.subr.mxu0 0.0
    %1321 = vmatpush1.xpose.msra.mxu0 0.0
    %1322 = vmatprep.subr.mxu0 0.0
    %1323 = vmatpush1.xpose.msra.mxu0 0.0
    %1324 = vmatprep.subr.mxu0 0.0
    %1325 = vmatpush1.xpose.msra.mxu0 0.0
    %1326 = vmatprep.subr.mxu0 0.0
    %1327 = vmatpush1.xpose.msra.mxu0 0.0
    %1328 = vmatprep.mubr.f32.mxu0 0.0
    %1329 = vmatmul.mubr.f32.gmra.mrb[0].mxu0 %v1260
    %v1330 = vpop.f32.mrb[0].mxu0
    %v1331 = vadd.f32 0.0, %v1330
    %v1332 = vpop.f32.mrb[0].mxu0
    %1333 = vdwg.mxu0
    %v1334 = vsel %vm190, %v1253, -inf
    %1335 = vmax.xlane.f32.xlu0 %v1334
    %v1336 = vpop.xlane.xlu0 %1335
    %v1337 = vsel %vm190, %v1331, -inf
    %1338 = vmax.xlane.f32.xlu0 %v1337
    %v1339 = vpop.xlane.xlu0 %1338
    %v1340 = vsub.f32 %v1253, %v1336
    %v1341 = vsub.f32 %v1331, %v1339
    %v1342 = vmul.f32 %v1340, 1.442695
    %v1343 = vpow.pop %v1342
    %v1344 = vmul.f32 %v1341, 1.442695
    %v1345 = vpow.pop %v1344
    %v1346 = vsel %vm190, %v1343, 0.0
    %1347 = vadd.xlane.f32.xlu0 %v1346
    %v1348 = vpop.xlane.xlu0 %1347
    %v1349 = vsel %vm190, %v1345, 0.0
    %1350 = vadd.xlane.f32.xlu0 %v1349
    %v1351 = vpop.xlane.xlu0 %1350
    %v1352 = vrcp.pop %v1348
    %v1353 = vrcp.pop %v1351
    %v1354 = vmul.f32 %v1343, %v1352
    %v1355 = vmul.f32 %v1345, %v1353
    %1356 = vrot.lane.b32.xlu0 %v177, 40
    %v1357 = vpop.permute.xlu0 %1356
    %v1360 = vsel %vm190, %v1354, 0
    %1362 = vmatprep.subr.mxu0 0.0
    %1363 = vmatpush1.msra.mxu0 %v1357
    %1364 = vmatprep.subr.mxu0 0.0
    %1365 = vmatpush1.msra.mxu0 0.0
    %1366 = vmatprep.subr.mxu0 0.0
    %1367 = vmatpush1.msra.mxu0 0.0
    %1368 = vmatprep.subr.mxu0 0.0
    %1369 = vmatpush1.msra.mxu0 0.0
    %1370 = vmatprep.subr.mxu0 0.0
    %1371 = vmatpush1.msra.mxu0 0.0
    %1372 = vmatprep.subr.mxu0 0.0
    %1373 = vmatpush1.msra.mxu0 0.0
    %1374 = vmatprep.subr.mxu0 0.0
    %1375 = vmatpush1.msra.mxu0 0.0
    %1376 = vmatprep.subr.mxu0 0.0
    %1377 = vmatpush1.msra.mxu0 0.0
    %1378 = vmatprep.subr.mxu0 0.0
    %1379 = vmatpush1.msra.mxu0 0.0
    %1380 = vmatprep.subr.mxu0 0.0
    %1381 = vmatpush1.msra.mxu0 0.0
    %1382 = vmatprep.subr.mxu0 0.0
    %1383 = vmatpush1.msra.mxu0 0.0
    %1384 = vmatprep.subr.mxu0 0.0
    %1385 = vmatpush1.msra.mxu0 0.0
    %1386 = vmatprep.subr.mxu0 0.0
    %1387 = vmatpush1.msra.mxu0 0.0
    %1388 = vmatprep.subr.mxu0 0.0
    %1389 = vmatpush1.msra.mxu0 0.0
    %1390 = vmatprep.subr.mxu0 0.0
    %1391 = vmatpush1.msra.mxu0 0.0
    %1392 = vmatprep.subr.mxu0 0.0
    %1393 = vmatpush1.msra.mxu0 0.0
    %1394 = vmatprep.subr.mxu0 0.0
    %1395 = vmatpush1.msra.mxu0 0.0
    %1396 = vmatprep.subr.mxu0 0.0
    %1397 = vmatpush1.msra.mxu0 0.0
    %1398 = vmatprep.subr.mxu0 0.0
    %1399 = vmatpush1.msra.mxu0 0.0
    %1400 = vmatprep.subr.mxu0 0.0
    %1401 = vmatpush1.msra.mxu0 0.0
    %1402 = vmatprep.subr.mxu0 0.0
    %1403 = vmatpush1.msra.mxu0 0.0
    %1404 = vmatprep.subr.mxu0 0.0
    %1405 = vmatpush1.msra.mxu0 0.0
    %1406 = vmatprep.subr.mxu0 0.0
    %1407 = vmatpush1.msra.mxu0 0.0
    %1408 = vmatprep.subr.mxu0 0.0
    %1409 = vmatpush1.msra.mxu0 0.0
    %1410 = vmatprep.subr.mxu0 0.0
    %1411 = vmatpush1.msra.mxu0 0.0
    %1412 = vmatprep.subr.mxu0 0.0
    %1413 = vmatpush1.msra.mxu0 0.0
    %1414 = vmatprep.subr.mxu0 0.0
    %1415 = vmatpush1.msra.mxu0 0.0
    %1416 = vmatprep.subr.mxu0 0.0
    %1417 = vmatpush1.msra.mxu0 0.0
    %1418 = vmatprep.subr.mxu0 0.0
    %1419 = vmatpush1.msra.mxu0 0.0
    %1420 = vmatprep.subr.mxu0 0.0
    %1421 = vmatpush1.msra.mxu0 0.0
    %1422 = vmatprep.subr.mxu0 0.0
    %1423 = vmatpush1.msra.mxu0 0.0
    %1424 = vmatprep.subr.mxu0 0.0
    %1425 = vmatpush1.msra.mxu0 0.0
    %1426 = vmatprep.mubr.f32.mxu0 0.0
    %1427 = vmatmul.mubr.f32.gmra.mrb[0].mxu0 %v1360
    %v1428 = vpop.f32.mrb[0].mxu0
    %v1429 = vadd.f32 0.0, %v1428
    %v1430 = vpop.f32.mrb[0].mxu0
    %1431 = vdwg.mxu0
    %1432 = vrot.lane.b32.xlu0 %v182, 40
    %v1433 = vpop.permute.xlu0 %1432
    %v1436 = vsel %vm190, %v1355, 0
    %1438 = vmatprep.subr.mxu0 0.0
    %1439 = vmatpush1.msra.mxu0 %v1433
    %1440 = vmatprep.subr.mxu0 0.0
    %1441 = vmatpush1.msra.mxu0 0.0
    %1442 = vmatprep.subr.mxu0 0.0
    %1443 = vmatpush1.msra.mxu0 0.0
    %1444 = vmatprep.subr.mxu0 0.0
    %1445 = vmatpush1.msra.mxu0 0.0
    %1446 = vmatprep.subr.mxu0 0.0
    %1447 = vmatpush1.msra.mxu0 0.0
    %1448 = vmatprep.subr.mxu0 0.0
    %1449 = vmatpush1.msra.mxu0 0.0
    %1450 = vmatprep.subr.mxu0 0.0
    %1451 = vmatpush1.msra.mxu0 0.0
    %1452 = vmatprep.subr.mxu0 0.0
    %1453 = vmatpush1.msra.mxu0 0.0
    %1454 = vmatprep.subr.mxu0 0.0
    %1455 = vmatpush1.msra.mxu0 0.0
    %1456 = vmatprep.subr.mxu0 0.0
    %1457 = vmatpush1.msra.mxu0 0.0
    %1458 = vmatprep.subr.mxu0 0.0
    %1459 = vmatpush1.msra.mxu0 0.0
    %1460 = vmatprep.subr.mxu0 0.0
    %1461 = vmatpush1.msra.mxu0 0.0
    %1462 = vmatprep.subr.mxu0 0.0
    %1463 = vmatpush1.msra.mxu0 0.0
    %1464 = vmatprep.subr.mxu0 0.0
    %1465 = vmatpush1.msra.mxu0 0.0
    %1466 = vmatprep.subr.mxu0 0.0
    %1467 = vmatpush1.msra.mxu0 0.0
    %1468 = vmatprep.subr.mxu0 0.0
    %1469 = vmatpush1.msra.mxu0 0.0
    %1470 = vmatprep.subr.mxu0 0.0
    %1471 = vmatpush1.msra.mxu0 0.0
    %1472 = vmatprep.subr.mxu0 0.0
    %1473 = vmatpush1.msra.mxu0 0.0
    %1474 = vmatprep.subr.mxu0 0.0
    %1475 = vmatpush1.msra.mxu0 0.0
    %1476 = vmatprep.subr.mxu0 0.0
    %1477 = vmatpush1.msra.mxu0 0.0
    %1478 = vmatprep.subr.mxu0 0.0
    %1479 = vmatpush1.msra.mxu0 0.0
    %1480 = vmatprep.subr.mxu0 0.0
    %1481 = vmatpush1.msra.mxu0 0.0
    %1482 = vmatprep.subr.mxu0 0.0
    %1483 = vmatpush1.msra.mxu0 0.0
    %1484 = vmatprep.subr.mxu0 0.0
    %1485 = vmatpush1.msra.mxu0 0.0
    %1486 = vmatprep.subr.mxu0 0.0
    %1487 = vmatpush1.msra.mxu0 0.0
    %1488 = vmatprep.subr.mxu0 0.0
    %1489 = vmatpush1.msra.mxu0 0.0
    %1490 = vmatprep.subr.mxu0 0.0
    %1491 = vmatpush1.msra.mxu0 0.0
    %1492 = vmatprep.subr.mxu0 0.0
    %1493 = vmatpush1.msra.mxu0 0.0
    %1494 = vmatprep.subr.mxu0 0.0
    %1495 = vmatpush1.msra.mxu0 0.0
    %1496 = vmatprep.subr.mxu0 0.0
    %1497 = vmatpush1.msra.mxu0 0.0
    %1498 = vmatprep.subr.mxu0 0.0
    %1499 = vmatpush1.msra.mxu0 0.0
    %1500 = vmatprep.subr.mxu0 0.0
    %1501 = vmatpush1.msra.mxu0 0.0
    %1502 = vmatprep.mubr.f32.mxu0 0.0
    %1503 = vmatmul.mubr.f32.gmra.mrb[0].mxu0 %v1436
    %v1504 = vpop.f32.mrb[0].mxu0
    %v1505 = vadd.f32 0.0, %v1504
    %v1506 = vpop.f32.mrb[0].mxu0
    %1507 = vdwg.mxu0
    %1510 = vrot.lane.b32.xlu0 %v769, 8
    %v1511 = vpop.permute.xlu0 %1510
    %1512 = vrot.lane.b32.xlu0 %v845, 8
    %v1513 = vpop.permute.xlu0 %1512
    %1518 = vrot.lane.b32.xlu0 %v1099, 16
    %v1519 = vpop.permute.xlu0 %1518
    %1520 = vrot.lane.b32.xlu0 %v1175, 16
    %v1521 = vpop.permute.xlu0 %1520
    %1526 = vrot.lane.b32.xlu0 %v1429, 24
    %v1527 = vpop.permute.xlu0 %1526
    %1528 = vrot.lane.b32.xlu0 %v1505, 24
    %v1529 = vpop.permute.xlu0 %1528
    %v1532 = vsel %vm190, %v439, %v1511
    %v1533 = vsel %vm190, %v515, %v1513
    %vm1534 = vcmask 130048
    %v1535 = vsel %vm1534, %v1532, %v1519
    %v1536 = vsel %vm1534, %v1533, %v1521
    %vm1537 = vcmask 195584
    %v1538 = vsel %vm1537, %v1535, %v1527
    %v1539 = vsel %vm1537, %v1536, %v1529
    %v1540 = vrot.slane %v365, 7
    %vm1541 = vcmask 1041409
    %v1542 = vsel %vm1541, %v1540, %v364
    %v1544 = vrot.slane %v695, 7
    %v1545 = vsel %vm1541, %v1544, %v694
    %1546 = vrot.lane.b32.xlu0 %v1545, 8
    %v1547 = vpop.permute.xlu0 %1546
    %v1549 = vrot.slane %v1025, 7
    %v1550 = vsel %vm1541, %v1549, %v1024
    %1551 = vrot.lane.b32.xlu0 %v1550, 16
    %v1552 = vpop.permute.xlu0 %1551
    %v1554 = vrot.slane %v1355, 7
    %v1555 = vsel %vm1541, %v1554, %v1354
    %1556 = vrot.lane.b32.xlu0 %v1555, 24
    %v1557 = vpop.permute.xlu0 %1556
    %v1559 = vsel %vm190, %v1542, %v1547
    %v1560 = vsel %vm1534, %v1559, %v1552
    %v1561 = vsel %vm1537, %v1560, %v1557
    %v1562 = vld [vmem:[#allocation5] sm:$0xff]
    %v1563 = vld [vmem:[#allocation5 + $0x8] sm:$0xff]
    %v1564 = vld [vmem:[#allocation5 + $0x10] sm:$0xff]
    %v1565 = vld [vmem:[#allocation5 + $0x18] sm:$0xff]
    %v1566 = vld [vmem:[%s3] sm:$0x1]
    %v1568 = vlaneseq
    %v1569 = vshrl.u32 %v1568, 7
    %v1570 = vsub.s32 0, %v1569
    %v1571 = vrot.slane %v1566, %v1570
    %1576 = vrot.lane.b32.xlu0 %v1562, 32
    %v1577 = vpop.permute.xlu0 %1576
    %1578 = vrot.lane.b32.xlu0 %v1563, 32
    %v1579 = vpop.permute.xlu0 %1578
    %1580 = vrot.lane.b32.xlu0 %v1564, 32
    %v1581 = vpop.permute.xlu0 %1580
    %1582 = vrot.lane.b32.xlu0 %v1565, 32
    %v1583 = vpop.permute.xlu0 %1582
    %1588 = vrot.lane.b32.xlu0 %v1571, 32
    %v1589 = vpop.permute.xlu0 %1588
    %v1592 = vsel %vm51, %v1538, 0
    %v1595 = vsel %vm51, %v1539, 0
    %1597 = vmatprep.subr.mxu0 0.0
    %1598 = vmatpush1.msra.mxu0 %v1577
    %1599 = vmatprep.subr.mxu0 0.0
    %1600 = vmatpush1.msra.mxu0 %v1579
    %1601 = vmatprep.subr.mxu0 0.0
    %1602 = vmatpush1.msra.mxu0 %v1581
    %1603 = vmatprep.subr.mxu0 0.0
    %1604 = vmatpush1.msra.mxu0 %v1583
    %1605 = vmatprep.subr.mxu0 0.0
    %1606 = vmatpush1.msra.mxu0 0.0
    %1607 = vmatprep.subr.mxu0 0.0
    %1608 = vmatpush1.msra.mxu0 0.0
    %1609 = vmatprep.subr.mxu0 0.0
    %1610 = vmatpush1.msra.mxu0 0.0
    %1611 = vmatprep.subr.mxu0 0.0
    %1612 = vmatpush1.msra.mxu0 0.0
    %1613 = vmatprep.subr.mxu0 0.0
    %1614 = vmatpush1.msra.mxu0 0.0
    %1615 = vmatprep.subr.mxu0 0.0
    %1616 = vmatpush1.msra.mxu0 0.0
    %1617 = vmatprep.subr.mxu0 0.0
    %1618 = vmatpush1.msra.mxu0 0.0
    %1619 = vmatprep.subr.mxu0 0.0
    %1620 = vmatpush1.msra.mxu0 0.0
    %1621 = vmatprep.subr.mxu0 0.0
    %1622 = vmatpush1.msra.mxu0 0.0
    %1623 = vmatprep.subr.mxu0 0.0
    %1624 = vmatpush1.msra.mxu0 0.0
    %1625 = vmatprep.subr.mxu0 0.0
    %1626 = vmatpush1.msra.mxu0 0.0
    %1627 = vmatprep.subr.mxu0 0.0
    %1628 = vmatpush1.msra.mxu0 0.0
    %1629 = vmatprep.subr.mxu0 0.0
    %1630 = vmatpush1.msra.mxu0 0.0
    %1631 = vmatprep.subr.mxu0 0.0
    %1632 = vmatpush1.msra.mxu0 0.0
    %1633 = vmatprep.subr.mxu0 0.0
    %1634 = vmatpush1.msra.mxu0 0.0
    %1635 = vmatprep.subr.mxu0 0.0
    %1636 = vmatpush1.msra.mxu0 0.0
    %1637 = vmatprep.subr.mxu0 0.0
    %1638 = vmatpush1.msra.mxu0 0.0
    %1639 = vmatprep.subr.mxu0 0.0
    %1640 = vmatpush1.msra.mxu0 0.0
    %1641 = vmatprep.subr.mxu0 0.0
    %1642 = vmatpush1.msra.mxu0 0.0
    %1643 = vmatprep.subr.mxu0 0.0
    %1644 = vmatpush1.msra.mxu0 0.0
    %1645 = vmatprep.subr.mxu0 0.0
    %1646 = vmatpush1.msra.mxu0 0.0
    %1647 = vmatprep.subr.mxu0 0.0
    %1648 = vmatpush1.msra.mxu0 0.0
    %1649 = vmatprep.subr.mxu0 0.0
    %1650 = vmatpush1.msra.mxu0 0.0
    %1651 = vmatprep.subr.mxu0 0.0
    %1652 = vmatpush1.msra.mxu0 0.0
    %1653 = vmatprep.subr.mxu0 0.0
    %1654 = vmatpush1.msra.mxu0 0.0
    %1655 = vmatprep.subr.mxu0 0.0
    %1656 = vmatpush1.msra.mxu0 0.0
    %1657 = vmatprep.subr.mxu0 0.0
    %1658 = vmatpush1.msra.mxu0 0.0
    %1659 = vmatprep.subr.mxu0 0.0
    %1660 = vmatpush1.msra.mxu0 0.0
    %1661 = vmatprep.mubr.f32.mxu0 0.0
    %1662 = vmatmul.mubr.f32.gmra.mrb[0].mxu0 %v1592
    %v1663 = vpop.f32.mrb[0].mxu0
    %v1664 = vadd.f32 %v1589, %v1663
    %v1665 = vpop.f32.mrb[0].mxu0
    %1666 = vmatprep.mubr.f32.mxu0 0.0
    %1667 = vmatmul.mubr.f32.gmra.mrb[0].mxu0 %v1595
    %v1668 = vpop.f32.mrb[0].mxu0
    %v1669 = vadd.f32 %v1589, %v1668
    %v1670 = vpop.f32.mrb[0].mxu0
    %1671 = vdwg.mxu0
    %1672 = vst.msk [vmem:[#allocation7] sm:$0xff] %vm51, %v1664
    %1673 = vst.msk [vmem:[#allocation7 + $0x8] sm:$0xff] %vm51, %v1669
    %vm1674 = vcmask 254976
    %1675 = vst.msk [vmem:[#allocation8] sm:$0x3] %vm1674, %v1561
    // Predicated region
    $region26: #{tpu_custom_call.1} parent=1 // pred_check
      _
    $region27: #{tpu_custom_call.1} parent=1 // pred_check_branch
      %1677 = sbr.rel (0) target = $region29
    $region28: #{tpu_custom_call.1} parent=1 // pred_region
      %s1679 = ssub.s32 256, 256
      %1680 = vsyncadd [#allocation4], %s1679
      %s1681 = sshll.u32 [#allocation7], 4
      %s1682 = int_to_ptr.vmem [resolvable:$true] %s1681
      %1687 = dma.vmem_to_hbm [thread:$0]  %s1682, 256, %s4, [#allocation4], 128, 128, 8
    $region29: #{tpu_custom_call.1} parent=1 // pred_fallthru
      _
    // Predicated region
    $region30: #{tpu_custom_call.1} parent=1 // pred_check
      _
    $region31: #{tpu_custom_call.1} parent=1 // pred_check_branch
      %1689 = sbr.rel (0) target = $region33
    $region32: #{tpu_custom_call.1} parent=1 // pred_region
      %s1691 = ssub.s32 32, 32
      %1692 = vsyncadd [#allocation9], %s1691
      %s1694 = sshll.u32 [#allocation8], 4
      %s1695 = int_to_ptr.vmem [resolvable:$true] %s1694
      %1697 = dma.vmem_to_hbm [thread:$0]  %s1695, 32, %s5, [#allocation9]
    $region33: #{tpu_custom_call.1} parent=1 // pred_fallthru
      _
    // Predicated region
    $region34: #{tpu_custom_call.1} parent=1 // pred_check
      _
    $region35: #{tpu_custom_call.1} parent=1 // pred_check_branch
      %1699 = sbr.rel (0) target = $region37
    $region36: #{tpu_custom_call.1} parent=1 // pred_region
      %1700 = dma.done [#allocation4], 256
    $region37: #{tpu_custom_call.1} parent=1 // pred_fallthru
      _
    // Predicated region
    $region38: #{tpu_custom_call.1} parent=1 // pred_check
      _
    $region39: #{tpu_custom_call.1} parent=1 // pred_check_branch
      %1702 = sbr.rel (0) target = $region41
    $region40: #{tpu_custom_call.1} parent=1 // pred_region
      %1703 = dma.done [#allocation9], 32
    $region41: #{tpu_custom_call.1} parent=1 // pred_fallthru
      _
    %1704 = vsyncpa [#allocation3], 1
    %1705 = vsyncpa [#allocation6], 1
    %1706 = vsyncpa [#allocation4], 1
    %1707 = vsyncpa [#allocation9], 1

</llo_original>
